<compile_context>
chip_gen: v5e
topology: v5e:2x2
jax: 0.10.0
libtpu: 0.0.40
codegen_flags: <defaults>
</compile_context>

<pallas_src>
import math

import jax
import jax.numpy as jnp
from jax.experimental import pallas as pl
from jax.experimental.pallas import tpu as pltpu

# ----------------------------- config ---------------------------------------
HIDDEN = 32
NUM_HEADS = 2
HEAD_DIM = HIDDEN // NUM_HEADS
NUM_LAYERS = 2
INTERMEDIATE = 64
SEQ = 8
BATCH = 2
VOCAB = 64
LABEL_NUM = 2
LN_EPS = 1e-5


# ----------------------------- fused kernel ---------------------------------
def _fused_forward_kernel(
    emb_ref, bias_ref, label_ref,
    emb_ln_g_ref, emb_ln_b_ref,
    wq_ref, bq_ref, wk_ref, bk_ref, wv_ref, bv_ref,
    wo_ref, bo_ref,
    ln1_g_ref, ln1_b_ref,
    w1_ref, b1_ref, w2_ref, b2_ref,
    ln2_g_ref, ln2_b_ref,
    wp_ref, bp_ref, wfc_ref, bfc_ref,
    loss_ref, correct_ref,
):
    """Whole BinaryClsBERT forward on a (B*S, H) slab resident in VMEM."""
    scale = 1.0 / math.sqrt(HEAD_DIM)

    def layer_norm(x, g, b):
        mu = jnp.mean(x, axis=-1, keepdims=True)
        xc = x - mu
        var = jnp.mean(xc * xc, axis=-1, keepdims=True)
        return xc * jax.lax.rsqrt(var + LN_EPS) * g + b

    def gelu(x):
        # tanh-approximation gelu (BERT-style)
        return 0.5 * x * (1.0 + jnp.tanh(0.7978845608028654 * (x + 0.044715 * x * x * x)))

    h = layer_norm(emb_ref[...], emb_ln_g_ref[...], emb_ln_b_ref[...])   # (B*S, H)
    bias = bias_ref[...]                                                 # (B*S, B*S)

    for li in range(NUM_LAYERS):
        # ---------------- self attention (per-head weight blocks) -----------
        attn = jnp.zeros_like(h)
        for hh in range(NUM_HEADS):
            w_idx = li * NUM_HEADS + hh
            qh = (jnp.dot(h, wq_ref[w_idx], preferred_element_type=jnp.float32)
                  + bq_ref[w_idx]) * scale                               # (B*S, DH)
            kh = jnp.dot(h, wk_ref[w_idx],
                         preferred_element_type=jnp.float32) + bk_ref[w_idx]
            vh = jnp.dot(h, wv_ref[w_idx],
                         preferred_element_type=jnp.float32) + bv_ref[w_idx]
            s = jax.lax.dot_general(qh, kh, (((1,), (1,)), ((), ())),
                                    preferred_element_type=jnp.float32)  # (B*S, B*S)
            s = s + bias                       # blocks cross-seq + padded keys
            s = s - jnp.max(s, axis=-1, keepdims=True)
            p = jnp.exp(s)
            p = p * pl.reciprocal(jnp.sum(p, axis=-1, keepdims=True), approx=True)
            ctx = jnp.dot(p, vh, preferred_element_type=jnp.float32)     # (B*S, DH)
            attn = attn + jnp.dot(ctx, wo_ref[w_idx],
                                  preferred_element_type=jnp.float32)    # (B*S, H)
        attn = attn + bo_ref[li]
        h = layer_norm(attn + h, ln1_g_ref[li], ln1_b_ref[li])

        # ---------------- feed forward ---------------------------------------
        ff = jnp.dot(h, w1_ref[li], preferred_element_type=jnp.float32) + b1_ref[li]
        ff = gelu(ff)
        ff = jnp.dot(ff, w2_ref[li], preferred_element_type=jnp.float32) + b2_ref[li]
        h = layer_norm(ff + h, ln2_g_ref[li], ln2_b_ref[li])

    # ---------------- pooler: first token of each sequence -------------------
    # selected with a one-hot matmul (avoids row gathers / concats in-kernel)
    ri = jax.lax.broadcasted_iota(jnp.int32, (BATCH, BATCH * SEQ), 0)
    ci = jax.lax.broadcasted_iota(jnp.int32, (BATCH, BATCH * SEQ), 1)
    sel = (ci == ri * SEQ).astype(jnp.float32)                           # (B, B*S)
    first_tok = jnp.dot(sel, h, preferred_element_type=jnp.float32)      # (B, H)
    pooled = jnp.tanh(jnp.dot(first_tok, wp_ref[...],
                              preferred_element_type=jnp.float32) + bp_ref[...])
    score = jnp.dot(pooled, wfc_ref[...],
                    preferred_element_type=jnp.float32) + bfc_ref[...]   # (B, L)

    # ---------------- cross entropy (mean) + #correct -------------------------
    lbl = label_ref[...]                                                 # (B, 1) int32
    m = jnp.max(score, axis=-1, keepdims=True)
    z = score - m
    lse = jnp.log(jnp.sum(jnp.exp(z), axis=-1, keepdims=True))
    logp = z - lse
    cls_idx = jax.lax.broadcasted_iota(jnp.int32, score.shape, 1)
    onehot = (cls_idx == lbl).astype(jnp.float32)
    nll = -jnp.sum(logp * onehot, axis=-1, keepdims=True)                # (B, 1)
    loss_ref[...] = jnp.sum(nll, axis=0, keepdims=True) * (1.0 / BATCH)

    # argmax (first max index), matching torch.max(score, dim=1)[1]
    cand = jnp.where(score == m, cls_idx, jnp.int32(LABEL_NUM))
    predict = jnp.min(cand, axis=-1, keepdims=True)                      # (B, 1)
    hit = (predict == lbl).astype(jnp.float32)
    correct_ref[...] = jnp.sum(hit, axis=0, keepdims=True)


# ----------------------------- params ----------------------------------------
def init_params(key):
    def dense(k, shape):
        return jax.random.normal(k, shape, jnp.float32) * 0.02

    L, H, I, NH, DH = NUM_LAYERS, HIDDEN, INTERMEDIATE, NUM_HEADS, HEAD_DIM
    keys = jax.random.split(key, 10)
    return {
        "word_emb": dense(keys[0], (VOCAB, H)),
        "pos_emb": dense(keys[1], (SEQ, H)),
        "emb_ln_g": jnp.ones((1, H), jnp.float32),
        "emb_ln_b": jnp.zeros((1, H), jnp.float32),
        # per-(layer, head) projection blocks stacked on one leading axis
        "wq": dense(keys[2], (L * NH, H, DH)),
        "bq": jnp.zeros((L * NH, 1, DH), jnp.float32),
        "wk": dense(keys[3], (L * NH, H, DH)),
        "bk": jnp.zeros((L * NH, 1, DH), jnp.float32),
        "wv": dense(keys[4], (L * NH, H, DH)),
        "bv": jnp.zeros((L * NH, 1, DH), jnp.float32),
        "wo": dense(keys[5], (L * NH, DH, H)),
        "bo": jnp.zeros((L, 1, H), jnp.float32),
        "ln1_g": jnp.ones((L, 1, H), jnp.float32),
        "ln1_b": jnp.zeros((L, 1, H), jnp.float32),
        "w1": dense(keys[6], (L, H, I)),
        "b1": jnp.zeros((L, 1, I), jnp.float32),
        "w2": dense(keys[7], (L, I, H)),
        "b2": jnp.zeros((L, 1, H), jnp.float32),
        "ln2_g": jnp.ones((L, 1, H), jnp.float32),
        "ln2_b": jnp.zeros((L, 1, H), jnp.float32),
        "wp": dense(keys[8], (H, H)),
        "bp": jnp.zeros((1, H), jnp.float32),
        "wfc": dense(keys[9], (H, LABEL_NUM)),
        "bfc": jnp.zeros((1, LABEL_NUM), jnp.float32),
    }


# ----------------------------- forward ----------------------------------------
@jax.jit
def _forward_core(params, inputx, mask, label):
    """Embedding glue + one fused Pallas kernel; returns (loss, correct)."""
    # token + position embeddings (XLA gather glue, fused inside the jit)
    we = jnp.take(params["word_emb"], inputx, axis=0)                    # (B, S, H)
    pe = params["pos_emb"][None, :, :]                                   # (1, S, H)
    emb = (we + pe).reshape(BATCH * SEQ, HIDDEN).astype(jnp.float32)

    # additive attention bias on the flattened (B*S, B*S) score matrix:
    # 0 where query & key belong to the same sequence AND the key is unpadded,
    # -1e9 otherwise (blocks cross-sequence attention + padded keys).
    seq_id = jnp.arange(BATCH * SEQ, dtype=jnp.int32) // SEQ
    same_seq = (seq_id[:, None] == seq_id[None, :]).astype(jnp.float32)
    key_ok = mask.astype(jnp.float32).reshape(1, BATCH * SEQ)
    attn_bias = (1.0 - same_seq * key_ok) * (-1e9)                       # (B*S, B*S)

    lbl = label.reshape(BATCH, 1).astype(jnp.int32)

    loss, correct = pl.pallas_call(
        _fused_forward_kernel,
        out_shape=(jax.ShapeDtypeStruct((1, 1), jnp.float32),
                   jax.ShapeDtypeStruct((1, 1), jnp.float32)),
        compiler_params=pltpu.CompilerParams(vmem_limit_bytes=32 * 1024 * 1024),
    )(emb, attn_bias, lbl,
      params["emb_ln_g"], params["emb_ln_b"],
      params["wq"], params["bq"], params["wk"], params["bk"],
      params["wv"], params["bv"], params["wo"], params["bo"],
      params["ln1_g"], params["ln1_b"],
      params["w1"], params["b1"], params["w2"], params["b2"],
      params["ln2_g"], params["ln2_b"],
      params["wp"], params["bp"], params["wfc"], params["bfc"])
    return loss[0, 0], correct[0, 0]


def binary_cls_bert_forward(params, data, acc_result=None):
    loss, correct = _forward_core(params, data["inputx"], data["mask"], data["label"])
    if acc_result is None:
        acc_result = {"total": 0, "right": 0}
    # host-side bookkeeping happens AFTER the jitted step (mirrors torch acc()).
    acc_result["total"] += int(data["label"].shape[0])
    acc_result["right"] += int(jax.device_get(correct))
    return {"loss": loss, "acc_result": acc_result}


# ----------------------------- main ------------------------------------------
if __name__ == "__main__":
    root = jax.random.PRNGKey(0)
    kp, kx = jax.random.split(root)
    params = init_params(kp)

    inputx = jax.random.randint(kx, (BATCH, SEQ), 0, VOCAB, dtype=jnp.int32)
    mask = jnp.array([[1, 1, 1, 1, 1, 1, 1, 1],
                      [1, 1, 1, 1, 1, 1, 0, 0]], dtype=jnp.int32)
    label = jnp.array([0, 1], dtype=jnp.int32)

    data = {"inputx": inputx, "mask": mask, "label": label}
    out = binary_cls_bert_forward(params, data, acc_result=None)
    jax.block_until_ready(out["loss"])
    assert out["acc_result"]["total"] == BATCH
    assert 0 <= out["acc_result"]["right"] <= BATCH
    print("KERNEL_OK")
</pallas_src>

<mosaic_0001>
module attributes {stable_mosaic.version = 11 : i64} {
  func.func @_fused_forward_kernel(%arg0: memref<16x32xf32, #tpu.memory_space<vmem>>, %arg1: memref<16x16xf32, #tpu.memory_space<vmem>>, %arg2: memref<2x1xi32, #tpu.memory_space<vmem>>, %arg3: memref<1x32xf32, #tpu.memory_space<vmem>>, %arg4: memref<1x32xf32, #tpu.memory_space<vmem>>, %arg5: memref<4x32x16xf32, #tpu.memory_space<vmem>>, %arg6: memref<4x1x16xf32, #tpu.memory_space<vmem>>, %arg7: memref<4x32x16xf32, #tpu.memory_space<vmem>>, %arg8: memref<4x1x16xf32, #tpu.memory_space<vmem>>, %arg9: memref<4x32x16xf32, #tpu.memory_space<vmem>>, %arg10: memref<4x1x16xf32, #tpu.memory_space<vmem>>, %arg11: memref<4x16x32xf32, #tpu.memory_space<vmem>>, %arg12: memref<2x1x32xf32, #tpu.memory_space<vmem>>, %arg13: memref<2x1x32xf32, #tpu.memory_space<vmem>>, %arg14: memref<2x1x32xf32, #tpu.memory_space<vmem>>, %arg15: memref<2x32x64xf32, #tpu.memory_space<vmem>>, %arg16: memref<2x1x64xf32, #tpu.memory_space<vmem>>, %arg17: memref<2x64x32xf32, #tpu.memory_space<vmem>>, %arg18: memref<2x1x32xf32, #tpu.memory_space<vmem>>, %arg19: memref<2x1x32xf32, #tpu.memory_space<vmem>>, %arg20: memref<2x1x32xf32, #tpu.memory_space<vmem>>, %arg21: memref<32x32xf32, #tpu.memory_space<vmem>>, %arg22: memref<1x32xf32, #tpu.memory_space<vmem>>, %arg23: memref<32x2xf32, #tpu.memory_space<vmem>>, %arg24: memref<1x2xf32, #tpu.memory_space<vmem>>, %arg25: memref<1x1xf32, #tpu.memory_space<vmem>>, %arg26: memref<1x1xf32, #tpu.memory_space<vmem>>) attributes {dimension_semantics = [], scalar_prefetch = 0 : i64, scratch_operands = 0 : i64, tpu.core_type = #tpu.core_type<tc>} {
    %c0 = arith.constant 0 : index
    %c0_0 = arith.constant 0 : index
    %0 = vector.load %arg0[%c0, %c0_0] : memref<16x32xf32, #tpu.memory_space<vmem>>, vector<16x32xf32>
    %c0_1 = arith.constant 0 : index
    %c0_2 = arith.constant 0 : index
    %1 = vector.load %arg3[%c0_1, %c0_2] : memref<1x32xf32, #tpu.memory_space<vmem>>, vector<1x32xf32>
    %c0_3 = arith.constant 0 : index
    %c0_4 = arith.constant 0 : index
    %2 = vector.load %arg4[%c0_3, %c0_4] : memref<1x32xf32, #tpu.memory_space<vmem>>, vector<1x32xf32>
    %cst = arith.constant dense<0.000000e+00> : vector<16xf32>
    %3 = vector.multi_reduction <add>, %0, %cst [1] : vector<16x32xf32> to vector<16xf32>
    %4 = vector.shape_cast %3 : vector<16xf32> to vector<16x1xf32>
    %cst_5 = arith.constant 3.200000e+01 : f32
    %5 = vector.broadcast %cst_5 : f32 to vector<16x1xf32>
    %6 = arith.divf %4, %5 : vector<16x1xf32>
    %7 = vector.broadcast %6 : vector<16x1xf32> to vector<16x32xf32>
    %8 = arith.subf %0, %7 : vector<16x32xf32>
    %9 = arith.mulf %8, %8 : vector<16x32xf32>
    %cst_6 = arith.constant dense<0.000000e+00> : vector<16xf32>
    %10 = vector.multi_reduction <add>, %9, %cst_6 [1] : vector<16x32xf32> to vector<16xf32>
    %11 = vector.shape_cast %10 : vector<16xf32> to vector<16x1xf32>
    %cst_7 = arith.constant 3.200000e+01 : f32
    %12 = vector.broadcast %cst_7 : f32 to vector<16x1xf32>
    %13 = arith.divf %11, %12 : vector<16x1xf32>
    %cst_8 = arith.constant 9.99999974E-6 : f32
    %14 = vector.broadcast %cst_8 : f32 to vector<16x1xf32>
    %15 = arith.addf %13, %14 : vector<16x1xf32>
    %16 = math.rsqrt %15 : vector<16x1xf32>
    %17 = vector.broadcast %16 : vector<16x1xf32> to vector<16x32xf32>
    %18 = arith.mulf %8, %17 : vector<16x32xf32>
    %19 = vector.broadcast %1 : vector<1x32xf32> to vector<16x32xf32>
    %20 = arith.mulf %18, %19 : vector<16x32xf32>
    %21 = vector.broadcast %2 : vector<1x32xf32> to vector<16x32xf32>
    %22 = arith.addf %20, %21 : vector<16x32xf32>
    %c0_9 = arith.constant 0 : index
    %c0_10 = arith.constant 0 : index
    %23 = vector.load %arg1[%c0_9, %c0_10] : memref<16x16xf32, #tpu.memory_space<vmem>>, vector<16x16xf32>
    %cst_11 = arith.constant 0.000000e+00 : f32
    %24 = vector.broadcast %cst_11 : f32 to vector<16x32xf32>
    %c0_12 = arith.constant 0 : index
    %c0_13 = arith.constant 0 : index
    %c0_14 = arith.constant 0 : index
    %25 = vector.load %arg5[%c0_12, %c0_13, %c0_14] : memref<4x32x16xf32, #tpu.memory_space<vmem>>, vector<1x32x16xf32>
    %26 = vector.shape_cast %25 : vector<1x32x16xf32> to vector<32x16xf32>
    %cst_15 = arith.constant dense<0.000000e+00> : vector<16x16xf32>
    %27 = tpu.matmul %22, %26, %cst_15 {dimension_numbers = #tpu.dot_dimension_numbers<[1], [0], [0], [1], [0, 0, 1, 1], [], []>} : vector<16x32xf32>, vector<32x16xf32>, vector<16x16xf32> -> vector<16x16xf32>
    %c0_16 = arith.constant 0 : index
    %c0_17 = arith.constant 0 : index
    %c0_18 = arith.constant 0 : index
    %28 = vector.load %arg6[%c0_16, %c0_17, %c0_18] : memref<4x1x16xf32, #tpu.memory_space<vmem>>, vector<1x1x16xf32>
    %29 = vector.shape_cast %28 : vector<1x1x16xf32> to vector<1x16xf32>
    %30 = vector.broadcast %29 : vector<1x16xf32> to vector<16x16xf32>
    %31 = arith.addf %27, %30 : vector<16x16xf32>
    %cst_19 = arith.constant 2.500000e-01 : f32
    %32 = vector.broadcast %cst_19 : f32 to vector<16x16xf32>
    %33 = arith.mulf %31, %32 : vector<16x16xf32>
    %c0_20 = arith.constant 0 : index
    %c0_21 = arith.constant 0 : index
    %c0_22 = arith.constant 0 : index
    %34 = vector.load %arg7[%c0_20, %c0_21, %c0_22] : memref<4x32x16xf32, #tpu.memory_space<vmem>>, vector<1x32x16xf32>
    %35 = vector.shape_cast %34 : vector<1x32x16xf32> to vector<32x16xf32>
    %cst_23 = arith.constant dense<0.000000e+00> : vector<16x16xf32>
    %36 = tpu.matmul %22, %35, %cst_23 {dimension_numbers = #tpu.dot_dimension_numbers<[1], [0], [0], [1], [0, 0, 1, 1], [], []>} : vector<16x32xf32>, vector<32x16xf32>, vector<16x16xf32> -> vector<16x16xf32>
    %c0_24 = arith.constant 0 : index
    %c0_25 = arith.constant 0 : index
    %c0_26 = arith.constant 0 : index
    %37 = vector.load %arg8[%c0_24, %c0_25, %c0_26] : memref<4x1x16xf32, #tpu.memory_space<vmem>>, vector<1x1x16xf32>
    %38 = vector.shape_cast %37 : vector<1x1x16xf32> to vector<1x16xf32>
    %39 = vector.broadcast %38 : vector<1x16xf32> to vector<16x16xf32>
    %40 = arith.addf %36, %39 : vector<16x16xf32>
    %c0_27 = arith.constant 0 : index
    %c0_28 = arith.constant 0 : index
    %c0_29 = arith.constant 0 : index
    %41 = vector.load %arg9[%c0_27, %c0_28, %c0_29] : memref<4x32x16xf32, #tpu.memory_space<vmem>>, vector<1x32x16xf32>
    %42 = vector.shape_cast %41 : vector<1x32x16xf32> to vector<32x16xf32>
    %cst_30 = arith.constant dense<0.000000e+00> : vector<16x16xf32>
    %43 = tpu.matmul %22, %42, %cst_30 {dimension_numbers = #tpu.dot_dimension_numbers<[1], [0], [0], [1], [0, 0, 1, 1], [], []>} : vector<16x32xf32>, vector<32x16xf32>, vector<16x16xf32> -> vector<16x16xf32>
    %c0_31 = arith.constant 0 : index
    %c0_32 = arith.constant 0 : index
    %c0_33 = arith.constant 0 : index
    %44 = vector.load %arg10[%c0_31, %c0_32, %c0_33] : memref<4x1x16xf32, #tpu.memory_space<vmem>>, vector<1x1x16xf32>
    %45 = vector.shape_cast %44 : vector<1x1x16xf32> to vector<1x16xf32>
    %46 = vector.broadcast %45 : vector<1x16xf32> to vector<16x16xf32>
    %47 = arith.addf %43, %46 : vector<16x16xf32>
    %cst_34 = arith.constant dense<0.000000e+00> : vector<16x16xf32>
    %48 = tpu.matmul %33, %40, %cst_34 {dimension_numbers = #tpu.dot_dimension_numbers<[1], [1], [0], [0], [0, 0, 1, 0], [], []>} : vector<16x16xf32>, vector<16x16xf32>, vector<16x16xf32> -> vector<16x16xf32>
    %49 = arith.addf %48, %23 : vector<16x16xf32>
    %cst_35 = arith.constant dense<0xFF800000> : vector<16xf32>
    %50 = vector.multi_reduction <maximumf>, %49, %cst_35 [1] : vector<16x16xf32> to vector<16xf32>
    %51 = vector.shape_cast %50 : vector<16xf32> to vector<16x1xf32>
    %52 = vector.broadcast %51 : vector<16x1xf32> to vector<16x16xf32>
    %53 = arith.subf %49, %52 : vector<16x16xf32>
    %54 = math.exp %53 : vector<16x16xf32>
    %cst_36 = arith.constant dense<0.000000e+00> : vector<16xf32>
    %55 = vector.multi_reduction <add>, %54, %cst_36 [1] : vector<16x16xf32> to vector<16xf32>
    %56 = vector.shape_cast %55 : vector<16xf32> to vector<16x1xf32>
    %57 = tpu.reciprocal %56 {approx = true} : vector<16x1xf32> -> vector<16x1xf32>
    %58 = vector.broadcast %57 : vector<16x1xf32> to vector<16x16xf32>
    %59 = arith.mulf %54, %58 : vector<16x16xf32>
    %cst_37 = arith.constant dense<0.000000e+00> : vector<16x16xf32>
    %60 = tpu.matmul %59, %47, %cst_37 {dimension_numbers = #tpu.dot_dimension_numbers<[1], [0], [0], [1], [0, 0, 1, 1], [], []>} : vector<16x16xf32>, vector<16x16xf32>, vector<16x16xf32> -> vector<16x16xf32>
    %c0_38 = arith.constant 0 : index
    %c0_39 = arith.constant 0 : index
    %c0_40 = arith.constant 0 : index
    %61 = vector.load %arg11[%c0_38, %c0_39, %c0_40] : memref<4x16x32xf32, #tpu.memory_space<vmem>>, vector<1x16x32xf32>
    %62 = vector.shape_cast %61 : vector<1x16x32xf32> to vector<16x32xf32>
    %cst_41 = arith.constant dense<0.000000e+00> : vector<16x32xf32>
    %63 = tpu.matmul %60, %62, %cst_41 {dimension_numbers = #tpu.dot_dimension_numbers<[1], [0], [0], [1], [0, 0, 1, 1], [], []>} : vector<16x16xf32>, vector<16x32xf32>, vector<16x32xf32> -> vector<16x32xf32>
    %64 = arith.addf %24, %63 : vector<16x32xf32>
    %c1 = arith.constant 1 : index
    %c0_42 = arith.constant 0 : index
    %c0_43 = arith.constant 0 : index
    %65 = vector.load %arg5[%c1, %c0_42, %c0_43] : memref<4x32x16xf32, #tpu.memory_space<vmem>>, vector<1x32x16xf32>
    %66 = vector.shape_cast %65 : vector<1x32x16xf32> to vector<32x16xf32>
    %cst_44 = arith.constant dense<0.000000e+00> : vector<16x16xf32>
    %67 = tpu.matmul %22, %66, %cst_44 {dimension_numbers = #tpu.dot_dimension_numbers<[1], [0], [0], [1], [0, 0, 1, 1], [], []>} : vector<16x32xf32>, vector<32x16xf32>, vector<16x16xf32> -> vector<16x16xf32>
    %c1_45 = arith.constant 1 : index
    %c0_46 = arith.constant 0 : index
    %c0_47 = arith.constant 0 : index
    %68 = vector.load %arg6[%c1_45, %c0_46, %c0_47] : memref<4x1x16xf32, #tpu.memory_space<vmem>>, vector<1x1x16xf32>
    %69 = vector.shape_cast %68 : vector<1x1x16xf32> to vector<1x16xf32>
    %70 = vector.broadcast %69 : vector<1x16xf32> to vector<16x16xf32>
    %71 = arith.addf %67, %70 : vector<16x16xf32>
    %cst_48 = arith.constant 2.500000e-01 : f32
    %72 = vector.broadcast %cst_48 : f32 to vector<16x16xf32>
    %73 = arith.mulf %71, %72 : vector<16x16xf32>
    %c1_49 = arith.constant 1 : index
    %c0_50 = arith.constant 0 : index
    %c0_51 = arith.constant 0 : index
    %74 = vector.load %arg7[%c1_49, %c0_50, %c0_51] : memref<4x32x16xf32, #tpu.memory_space<vmem>>, vector<1x32x16xf32>
    %75 = vector.shape_cast %74 : vector<1x32x16xf32> to vector<32x16xf32>
    %cst_52 = arith.constant dense<0.000000e+00> : vector<16x16xf32>
    %76 = tpu.matmul %22, %75, %cst_52 {dimension_numbers = #tpu.dot_dimension_numbers<[1], [0], [0], [1], [0, 0, 1, 1], [], []>} : vector<16x32xf32>, vector<32x16xf32>, vector<16x16xf32> -> vector<16x16xf32>
    %c1_53 = arith.constant 1 : index
    %c0_54 = arith.constant 0 : index
    %c0_55 = arith.constant 0 : index
    %77 = vector.load %arg8[%c1_53, %c0_54, %c0_55] : memref<4x1x16xf32, #tpu.memory_space<vmem>>, vector<1x1x16xf32>
    %78 = vector.shape_cast %77 : vector<1x1x16xf32> to vector<1x16xf32>
    %79 = vector.broadcast %78 : vector<1x16xf32> to vector<16x16xf32>
    %80 = arith.addf %76, %79 : vector<16x16xf32>
    %c1_56 = arith.constant 1 : index
    %c0_57 = arith.constant 0 : index
    %c0_58 = arith.constant 0 : index
    %81 = vector.load %arg9[%c1_56, %c0_57, %c0_58] : memref<4x32x16xf32, #tpu.memory_space<vmem>>, vector<1x32x16xf32>
    %82 = vector.shape_cast %81 : vector<1x32x16xf32> to vector<32x16xf32>
    %cst_59 = arith.constant dense<0.000000e+00> : vector<16x16xf32>
    %83 = tpu.matmul %22, %82, %cst_59 {dimension_numbers = #tpu.dot_dimension_numbers<[1], [0], [0], [1], [0, 0, 1, 1], [], []>} : vector<16x32xf32>, vector<32x16xf32>, vector<16x16xf32> -> vector<16x16xf32>
    %c1_60 = arith.constant 1 : index
    %c0_61 = arith.constant 0 : index
    %c0_62 = arith.constant 0 : index
    %84 = vector.load %arg10[%c1_60, %c0_61, %c0_62] : memref<4x1x16xf32, #tpu.memory_space<vmem>>, vector<1x1x16xf32>
    %85 = vector.shape_cast %84 : vector<1x1x16xf32> to vector<1x16xf32>
    %86 = vector.broadcast %85 : vector<1x16xf32> to vector<16x16xf32>
    %87 = arith.addf %83, %86 : vector<16x16xf32>
    %cst_63 = arith.constant dense<0.000000e+00> : vector<16x16xf32>
    %88 = tpu.matmul %73, %80, %cst_63 {dimension_numbers = #tpu.dot_dimension_numbers<[1], [1], [0], [0], [0, 0, 1, 0], [], []>} : vector<16x16xf32>, vector<16x16xf32>, vector<16x16xf32> -> vector<16x16xf32>
    %89 = arith.addf %88, %23 : vector<16x16xf32>
    %cst_64 = arith.constant dense<0xFF800000> : vector<16xf32>
    %90 = vector.multi_reduction <maximumf>, %89, %cst_64 [1] : vector<16x16xf32> to vector<16xf32>
    %91 = vector.shape_cast %90 : vector<16xf32> to vector<16x1xf32>
    %92 = vector.broadcast %91 : vector<16x1xf32> to vector<16x16xf32>
    %93 = arith.subf %89, %92 : vector<16x16xf32>
    %94 = math.exp %93 : vector<16x16xf32>
    %cst_65 = arith.constant dense<0.000000e+00> : vector<16xf32>
    %95 = vector.multi_reduction <add>, %94, %cst_65 [1] : vector<16x16xf32> to vector<16xf32>
    %96 = vector.shape_cast %95 : vector<16xf32> to vector<16x1xf32>
    %97 = tpu.reciprocal %96 {approx = true} : vector<16x1xf32> -> vector<16x1xf32>
    %98 = vector.broadcast %97 : vector<16x1xf32> to vector<16x16xf32>
    %99 = arith.mulf %94, %98 : vector<16x16xf32>
    %cst_66 = arith.constant dense<0.000000e+00> : vector<16x16xf32>
    %100 = tpu.matmul %99, %87, %cst_66 {dimension_numbers = #tpu.dot_dimension_numbers<[1], [0], [0], [1], [0, 0, 1, 1], [], []>} : vector<16x16xf32>, vector<16x16xf32>, vector<16x16xf32> -> vector<16x16xf32>
    %c1_67 = arith.constant 1 : index
    %c0_68 = arith.constant 0 : index
    %c0_69 = arith.constant 0 : index
    %101 = vector.load %arg11[%c1_67, %c0_68, %c0_69] : memref<4x16x32xf32, #tpu.memory_space<vmem>>, vector<1x16x32xf32>
    %102 = vector.shape_cast %101 : vector<1x16x32xf32> to vector<16x32xf32>
    %cst_70 = arith.constant dense<0.000000e+00> : vector<16x32xf32>
    %103 = tpu.matmul %100, %102, %cst_70 {dimension_numbers = #tpu.dot_dimension_numbers<[1], [0], [0], [1], [0, 0, 1, 1], [], []>} : vector<16x16xf32>, vector<16x32xf32>, vector<16x32xf32> -> vector<16x32xf32>
    %104 = arith.addf %64, %103 : vector<16x32xf32>
    %c0_71 = arith.constant 0 : index
    %c0_72 = arith.constant 0 : index
    %c0_73 = arith.constant 0 : index
    %105 = vector.load %arg12[%c0_71, %c0_72, %c0_73] : memref<2x1x32xf32, #tpu.memory_space<vmem>>, vector<1x1x32xf32>
    %106 = vector.shape_cast %105 : vector<1x1x32xf32> to vector<1x32xf32>
    %107 = vector.broadcast %106 : vector<1x32xf32> to vector<16x32xf32>
    %108 = arith.addf %104, %107 : vector<16x32xf32>
    %109 = arith.addf %108, %22 : vector<16x32xf32>
    %c0_74 = arith.constant 0 : index
    %c0_75 = arith.constant 0 : index
    %c0_76 = arith.constant 0 : index
    %110 = vector.load %arg13[%c0_74, %c0_75, %c0_76] : memref<2x1x32xf32, #tpu.memory_space<vmem>>, vector<1x1x32xf32>
    %111 = vector.shape_cast %110 : vector<1x1x32xf32> to vector<1x32xf32>
    %c0_77 = arith.constant 0 : index
    %c0_78 = arith.constant 0 : index
    %c0_79 = arith.constant 0 : index
    %112 = vector.load %arg14[%c0_77, %c0_78, %c0_79] : memref<2x1x32xf32, #tpu.memory_space<vmem>>, vector<1x1x32xf32>
    %113 = vector.shape_cast %112 : vector<1x1x32xf32> to vector<1x32xf32>
    %cst_80 = arith.constant dense<0.000000e+00> : vector<16xf32>
    %114 = vector.multi_reduction <add>, %109, %cst_80 [1] : vector<16x32xf32> to vector<16xf32>
    %115 = vector.shape_cast %114 : vector<16xf32> to vector<16x1xf32>
    %cst_81 = arith.constant 3.200000e+01 : f32
    %116 = vector.broadcast %cst_81 : f32 to vector<16x1xf32>
    %117 = arith.divf %115, %116 : vector<16x1xf32>
    %118 = vector.broadcast %117 : vector<16x1xf32> to vector<16x32xf32>
    %119 = arith.subf %109, %118 : vector<16x32xf32>
    %120 = arith.mulf %119, %119 : vector<16x32xf32>
    %cst_82 = arith.constant dense<0.000000e+00> : vector<16xf32>
    %121 = vector.multi_reduction <add>, %120, %cst_82 [1] : vector<16x32xf32> to vector<16xf32>
    %122 = vector.shape_cast %121 : vector<16xf32> to vector<16x1xf32>
    %cst_83 = arith.constant 3.200000e+01 : f32
    %123 = vector.broadcast %cst_83 : f32 to vector<16x1xf32>
    %124 = arith.divf %122, %123 : vector<16x1xf32>
    %cst_84 = arith.constant 9.99999974E-6 : f32
    %125 = vector.broadcast %cst_84 : f32 to vector<16x1xf32>
    %126 = arith.addf %124, %125 : vector<16x1xf32>
    %127 = math.rsqrt %126 : vector<16x1xf32>
    %128 = vector.broadcast %127 : vector<16x1xf32> to vector<16x32xf32>
    %129 = arith.mulf %119, %128 : vector<16x32xf32>
    %130 = vector.broadcast %111 : vector<1x32xf32> to vector<16x32xf32>
    %131 = arith.mulf %129, %130 : vector<16x32xf32>
    %132 = vector.broadcast %113 : vector<1x32xf32> to vector<16x32xf32>
    %133 = arith.addf %131, %132 : vector<16x32xf32>
    %c0_85 = arith.constant 0 : index
    %c0_86 = arith.constant 0 : index
    %c0_87 = arith.constant 0 : index
    %134 = vector.load %arg15[%c0_85, %c0_86, %c0_87] : memref<2x32x64xf32, #tpu.memory_space<vmem>>, vector<1x32x64xf32>
    %135 = vector.shape_cast %134 : vector<1x32x64xf32> to vector<32x64xf32>
    %cst_88 = arith.constant dense<0.000000e+00> : vector<16x64xf32>
    %136 = tpu.matmul %133, %135, %cst_88 {dimension_numbers = #tpu.dot_dimension_numbers<[1], [0], [0], [1], [0, 0, 1, 1], [], []>} : vector<16x32xf32>, vector<32x64xf32>, vector<16x64xf32> -> vector<16x64xf32>
    %c0_89 = arith.constant 0 : index
    %c0_90 = arith.constant 0 : index
    %c0_91 = arith.constant 0 : index
    %137 = vector.load %arg16[%c0_89, %c0_90, %c0_91] : memref<2x1x64xf32, #tpu.memory_space<vmem>>, vector<1x1x64xf32>
    %138 = vector.shape_cast %137 : vector<1x1x64xf32> to vector<1x64xf32>
    %139 = vector.broadcast %138 : vector<1x64xf32> to vector<16x64xf32>
    %140 = arith.addf %136, %139 : vector<16x64xf32>
    %cst_92 = arith.constant 5.000000e-01 : f32
    %141 = vector.broadcast %cst_92 : f32 to vector<16x64xf32>
    %142 = arith.mulf %141, %140 : vector<16x64xf32>
    %cst_93 = arith.constant 4.471500e-02 : f32
    %143 = vector.broadcast %cst_93 : f32 to vector<16x64xf32>
    %144 = arith.mulf %143, %140 : vector<16x64xf32>
    %145 = arith.mulf %144, %140 : vector<16x64xf32>
    %146 = arith.mulf %145, %140 : vector<16x64xf32>
    %147 = arith.addf %140, %146 : vector<16x64xf32>
    %cst_94 = arith.constant 0.797884583 : f32
    %148 = vector.broadcast %cst_94 : f32 to vector<16x64xf32>
    %149 = arith.mulf %148, %147 : vector<16x64xf32>
    %150 = math.tanh %149 : vector<16x64xf32>
    %cst_95 = arith.constant 1.000000e+00 : f32
    %151 = vector.broadcast %cst_95 : f32 to vector<16x64xf32>
    %152 = arith.addf %151, %150 : vector<16x64xf32>
    %153 = arith.mulf %142, %152 : vector<16x64xf32>
    %c0_96 = arith.constant 0 : index
    %c0_97 = arith.constant 0 : index
    %c0_98 = arith.constant 0 : index
    %154 = vector.load %arg17[%c0_96, %c0_97, %c0_98] : memref<2x64x32xf32, #tpu.memory_space<vmem>>, vector<1x64x32xf32>
    %155 = vector.shape_cast %154 : vector<1x64x32xf32> to vector<64x32xf32>
    %cst_99 = arith.constant dense<0.000000e+00> : vector<16x32xf32>
    %156 = tpu.matmul %153, %155, %cst_99 {dimension_numbers = #tpu.dot_dimension_numbers<[1], [0], [0], [1], [0, 0, 1, 1], [], []>} : vector<16x64xf32>, vector<64x32xf32>, vector<16x32xf32> -> vector<16x32xf32>
    %c0_100 = arith.constant 0 : index
    %c0_101 = arith.constant 0 : index
    %c0_102 = arith.constant 0 : index
    %157 = vector.load %arg18[%c0_100, %c0_101, %c0_102] : memref<2x1x32xf32, #tpu.memory_space<vmem>>, vector<1x1x32xf32>
    %158 = vector.shape_cast %157 : vector<1x1x32xf32> to vector<1x32xf32>
    %159 = vector.broadcast %158 : vector<1x32xf32> to vector<16x32xf32>
    %160 = arith.addf %156, %159 : vector<16x32xf32>
    %161 = arith.addf %160, %133 : vector<16x32xf32>
    %c0_103 = arith.constant 0 : index
    %c0_104 = arith.constant 0 : index
    %c0_105 = arith.constant 0 : index
    %162 = vector.load %arg19[%c0_103, %c0_104, %c0_105] : memref<2x1x32xf32, #tpu.memory_space<vmem>>, vector<1x1x32xf32>
    %163 = vector.shape_cast %162 : vector<1x1x32xf32> to vector<1x32xf32>
    %c0_106 = arith.constant 0 : index
    %c0_107 = arith.constant 0 : index
    %c0_108 = arith.constant 0 : index
    %164 = vector.load %arg20[%c0_106, %c0_107, %c0_108] : memref<2x1x32xf32, #tpu.memory_space<vmem>>, vector<1x1x32xf32>
    %165 = vector.shape_cast %164 : vector<1x1x32xf32> to vector<1x32xf32>
    %cst_109 = arith.constant dense<0.000000e+00> : vector<16xf32>
    %166 = vector.multi_reduction <add>, %161, %cst_109 [1] : vector<16x32xf32> to vector<16xf32>
    %167 = vector.shape_cast %166 : vector<16xf32> to vector<16x1xf32>
    %cst_110 = arith.constant 3.200000e+01 : f32
    %168 = vector.broadcast %cst_110 : f32 to vector<16x1xf32>
    %169 = arith.divf %167, %168 : vector<16x1xf32>
    %170 = vector.broadcast %169 : vector<16x1xf32> to vector<16x32xf32>
    %171 = arith.subf %161, %170 : vector<16x32xf32>
    %172 = arith.mulf %171, %171 : vector<16x32xf32>
    %cst_111 = arith.constant dense<0.000000e+00> : vector<16xf32>
    %173 = vector.multi_reduction <add>, %172, %cst_111 [1] : vector<16x32xf32> to vector<16xf32>
    %174 = vector.shape_cast %173 : vector<16xf32> to vector<16x1xf32>
    %cst_112 = arith.constant 3.200000e+01 : f32
    %175 = vector.broadcast %cst_112 : f32 to vector<16x1xf32>
    %176 = arith.divf %174, %175 : vector<16x1xf32>
    %cst_113 = arith.constant 9.99999974E-6 : f32
    %177 = vector.broadcast %cst_113 : f32 to vector<16x1xf32>
    %178 = arith.addf %176, %177 : vector<16x1xf32>
    %179 = math.rsqrt %178 : vector<16x1xf32>
    %180 = vector.broadcast %179 : vector<16x1xf32> to vector<16x32xf32>
    %181 = arith.mulf %171, %180 : vector<16x32xf32>
    %182 = vector.broadcast %163 : vector<1x32xf32> to vector<16x32xf32>
    %183 = arith.mulf %181, %182 : vector<16x32xf32>
    %184 = vector.broadcast %165 : vector<1x32xf32> to vector<16x32xf32>
    %185 = arith.addf %183, %184 : vector<16x32xf32>
    %cst_114 = arith.constant 0.000000e+00 : f32
    %186 = vector.broadcast %cst_114 : f32 to vector<16x32xf32>
    %c2 = arith.constant 2 : index
    %c0_115 = arith.constant 0 : index
    %c0_116 = arith.constant 0 : index
    %187 = vector.load %arg5[%c2, %c0_115, %c0_116] : memref<4x32x16xf32, #tpu.memory_space<vmem>>, vector<1x32x16xf32>
    %188 = vector.shape_cast %187 : vector<1x32x16xf32> to vector<32x16xf32>
    %cst_117 = arith.constant dense<0.000000e+00> : vector<16x16xf32>
    %189 = tpu.matmul %185, %188, %cst_117 {dimension_numbers = #tpu.dot_dimension_numbers<[1], [0], [0], [1], [0, 0, 1, 1], [], []>} : vector<16x32xf32>, vector<32x16xf32>, vector<16x16xf32> -> vector<16x16xf32>
    %c2_118 = arith.constant 2 : index
    %c0_119 = arith.constant 0 : index
    %c0_120 = arith.constant 0 : index
    %190 = vector.load %arg6[%c2_118, %c0_119, %c0_120] : memref<4x1x16xf32, #tpu.memory_space<vmem>>, vector<1x1x16xf32>
    %191 = vector.shape_cast %190 : vector<1x1x16xf32> to vector<1x16xf32>
    %192 = vector.broadcast %191 : vector<1x16xf32> to vector<16x16xf32>
    %193 = arith.addf %189, %192 : vector<16x16xf32>
    %cst_121 = arith.constant 2.500000e-01 : f32
    %194 = vector.broadcast %cst_121 : f32 to vector<16x16xf32>
    %195 = arith.mulf %193, %194 : vector<16x16xf32>
    %c2_122 = arith.constant 2 : index
    %c0_123 = arith.constant 0 : index
    %c0_124 = arith.constant 0 : index
    %196 = vector.load %arg7[%c2_122, %c0_123, %c0_124] : memref<4x32x16xf32, #tpu.memory_space<vmem>>, vector<1x32x16xf32>
    %197 = vector.shape_cast %196 : vector<1x32x16xf32> to vector<32x16xf32>
    %cst_125 = arith.constant dense<0.000000e+00> : vector<16x16xf32>
    %198 = tpu.matmul %185, %197, %cst_125 {dimension_numbers = #tpu.dot_dimension_numbers<[1], [0], [0], [1], [0, 0, 1, 1], [], []>} : vector<16x32xf32>, vector<32x16xf32>, vector<16x16xf32> -> vector<16x16xf32>
    %c2_126 = arith.constant 2 : index
    %c0_127 = arith.constant 0 : index
    %c0_128 = arith.constant 0 : index
    %199 = vector.load %arg8[%c2_126, %c0_127, %c0_128] : memref<4x1x16xf32, #tpu.memory_space<vmem>>, vector<1x1x16xf32>
    %200 = vector.shape_cast %199 : vector<1x1x16xf32> to vector<1x16xf32>
    %201 = vector.broadcast %200 : vector<1x16xf32> to vector<16x16xf32>
    %202 = arith.addf %198, %201 : vector<16x16xf32>
    %c2_129 = arith.constant 2 : index
    %c0_130 = arith.constant 0 : index
    %c0_131 = arith.constant 0 : index
    %203 = vector.load %arg9[%c2_129, %c0_130, %c0_131] : memref<4x32x16xf32, #tpu.memory_space<vmem>>, vector<1x32x16xf32>
    %204 = vector.shape_cast %203 : vector<1x32x16xf32> to vector<32x16xf32>
    %cst_132 = arith.constant dense<0.000000e+00> : vector<16x16xf32>
    %205 = tpu.matmul %185, %204, %cst_132 {dimension_numbers = #tpu.dot_dimension_numbers<[1], [0], [0], [1], [0, 0, 1, 1], [], []>} : vector<16x32xf32>, vector<32x16xf32>, vector<16x16xf32> -> vector<16x16xf32>
    %c2_133 = arith.constant 2 : index
    %c0_134 = arith.constant 0 : index
    %c0_135 = arith.constant 0 : index
    %206 = vector.load %arg10[%c2_133, %c0_134, %c0_135] : memref<4x1x16xf32, #tpu.memory_space<vmem>>, vector<1x1x16xf32>
    %207 = vector.shape_cast %206 : vector<1x1x16xf32> to vector<1x16xf32>
    %208 = vector.broadcast %207 : vector<1x16xf32> to vector<16x16xf32>
    %209 = arith.addf %205, %208 : vector<16x16xf32>
    %cst_136 = arith.constant dense<0.000000e+00> : vector<16x16xf32>
    %210 = tpu.matmul %195, %202, %cst_136 {dimension_numbers = #tpu.dot_dimension_numbers<[1], [1], [0], [0], [0, 0, 1, 0], [], []>} : vector<16x16xf32>, vector<16x16xf32>, vector<16x16xf32> -> vector<16x16xf32>
    %211 = arith.addf %210, %23 : vector<16x16xf32>
    %cst_137 = arith.constant dense<0xFF800000> : vector<16xf32>
    %212 = vector.multi_reduction <maximumf>, %211, %cst_137 [1] : vector<16x16xf32> to vector<16xf32>
    %213 = vector.shape_cast %212 : vector<16xf32> to vector<16x1xf32>
    %214 = vector.broadcast %213 : vector<16x1xf32> to vector<16x16xf32>
    %215 = arith.subf %211, %214 : vector<16x16xf32>
    %216 = math.exp %215 : vector<16x16xf32>
    %cst_138 = arith.constant dense<0.000000e+00> : vector<16xf32>
    %217 = vector.multi_reduction <add>, %216, %cst_138 [1] : vector<16x16xf32> to vector<16xf32>
    %218 = vector.shape_cast %217 : vector<16xf32> to vector<16x1xf32>
    %219 = tpu.reciprocal %218 {approx = true} : vector<16x1xf32> -> vector<16x1xf32>
    %220 = vector.broadcast %219 : vector<16x1xf32> to vector<16x16xf32>
    %221 = arith.mulf %216, %220 : vector<16x16xf32>
    %cst_139 = arith.constant dense<0.000000e+00> : vector<16x16xf32>
    %222 = tpu.matmul %221, %209, %cst_139 {dimension_numbers = #tpu.dot_dimension_numbers<[1], [0], [0], [1], [0, 0, 1, 1], [], []>} : vector<16x16xf32>, vector<16x16xf32>, vector<16x16xf32> -> vector<16x16xf32>
    %c2_140 = arith.constant 2 : index
    %c0_141 = arith.constant 0 : index
    %c0_142 = arith.constant 0 : index
    %223 = vector.load %arg11[%c2_140, %c0_141, %c0_142] : memref<4x16x32xf32, #tpu.memory_space<vmem>>, vector<1x16x32xf32>
    %224 = vector.shape_cast %223 : vector<1x16x32xf32> to vector<16x32xf32>
    %cst_143 = arith.constant dense<0.000000e+00> : vector<16x32xf32>
    %225 = tpu.matmul %222, %224, %cst_143 {dimension_numbers = #tpu.dot_dimension_numbers<[1], [0], [0], [1], [0, 0, 1, 1], [], []>} : vector<16x16xf32>, vector<16x32xf32>, vector<16x32xf32> -> vector<16x32xf32>
    %226 = arith.addf %186, %225 : vector<16x32xf32>
    %c3 = arith.constant 3 : index
    %c0_144 = arith.constant 0 : index
    %c0_145 = arith.constant 0 : index
    %227 = vector.load %arg5[%c3, %c0_144, %c0_145] : memref<4x32x16xf32, #tpu.memory_space<vmem>>, vector<1x32x16xf32>
    %228 = vector.shape_cast %227 : vector<1x32x16xf32> to vector<32x16xf32>
    %cst_146 = arith.constant dense<0.000000e+00> : vector<16x16xf32>
    %229 = tpu.matmul %185, %228, %cst_146 {dimension_numbers = #tpu.dot_dimension_numbers<[1], [0], [0], [1], [0, 0, 1, 1], [], []>} : vector<16x32xf32>, vector<32x16xf32>, vector<16x16xf32> -> vector<16x16xf32>
    %c3_147 = arith.constant 3 : index
    %c0_148 = arith.constant 0 : index
    %c0_149 = arith.constant 0 : index
    %230 = vector.load %arg6[%c3_147, %c0_148, %c0_149] : memref<4x1x16xf32, #tpu.memory_space<vmem>>, vector<1x1x16xf32>
    %231 = vector.shape_cast %230 : vector<1x1x16xf32> to vector<1x16xf32>
    %232 = vector.broadcast %231 : vector<1x16xf32> to vector<16x16xf32>
    %233 = arith.addf %229, %232 : vector<16x16xf32>
    %cst_150 = arith.constant 2.500000e-01 : f32
    %234 = vector.broadcast %cst_150 : f32 to vector<16x16xf32>
    %235 = arith.mulf %233, %234 : vector<16x16xf32>
    %c3_151 = arith.constant 3 : index
    %c0_152 = arith.constant 0 : index
    %c0_153 = arith.constant 0 : index
    %236 = vector.load %arg7[%c3_151, %c0_152, %c0_153] : memref<4x32x16xf32, #tpu.memory_space<vmem>>, vector<1x32x16xf32>
    %237 = vector.shape_cast %236 : vector<1x32x16xf32> to vector<32x16xf32>
    %cst_154 = arith.constant dense<0.000000e+00> : vector<16x16xf32>
    %238 = tpu.matmul %185, %237, %cst_154 {dimension_numbers = #tpu.dot_dimension_numbers<[1], [0], [0], [1], [0, 0, 1, 1], [], []>} : vector<16x32xf32>, vector<32x16xf32>, vector<16x16xf32> -> vector<16x16xf32>
    %c3_155 = arith.constant 3 : index
    %c0_156 = arith.constant 0 : index
    %c0_157 = arith.constant 0 : index
    %239 = vector.load %arg8[%c3_155, %c0_156, %c0_157] : memref<4x1x16xf32, #tpu.memory_space<vmem>>, vector<1x1x16xf32>
    %240 = vector.shape_cast %239 : vector<1x1x16xf32> to vector<1x16xf32>
    %241 = vector.broadcast %240 : vector<1x16xf32> to vector<16x16xf32>
    %242 = arith.addf %238, %241 : vector<16x16xf32>
    %c3_158 = arith.constant 3 : index
    %c0_159 = arith.constant 0 : index
    %c0_160 = arith.constant 0 : index
    %243 = vector.load %arg9[%c3_158, %c0_159, %c0_160] : memref<4x32x16xf32, #tpu.memory_space<vmem>>, vector<1x32x16xf32>
    %244 = vector.shape_cast %243 : vector<1x32x16xf32> to vector<32x16xf32>
    %cst_161 = arith.constant dense<0.000000e+00> : vector<16x16xf32>
    %245 = tpu.matmul %185, %244, %cst_161 {dimension_numbers = #tpu.dot_dimension_numbers<[1], [0], [0], [1], [0, 0, 1, 1], [], []>} : vector<16x32xf32>, vector<32x16xf32>, vector<16x16xf32> -> vector<16x16xf32>
    %c3_162 = arith.constant 3 : index
    %c0_163 = arith.constant 0 : index
    %c0_164 = arith.constant 0 : index
    %246 = vector.load %arg10[%c3_162, %c0_163, %c0_164] : memref<4x1x16xf32, #tpu.memory_space<vmem>>, vector<1x1x16xf32>
    %247 = vector.shape_cast %246 : vector<1x1x16xf32> to vector<1x16xf32>
    %248 = vector.broadcast %247 : vector<1x16xf32> to vector<16x16xf32>
    %249 = arith.addf %245, %248 : vector<16x16xf32>
    %cst_165 = arith.constant dense<0.000000e+00> : vector<16x16xf32>
    %250 = tpu.matmul %235, %242, %cst_165 {dimension_numbers = #tpu.dot_dimension_numbers<[1], [1], [0], [0], [0, 0, 1, 0], [], []>} : vector<16x16xf32>, vector<16x16xf32>, vector<16x16xf32> -> vector<16x16xf32>
    %251 = arith.addf %250, %23 : vector<16x16xf32>
    %cst_166 = arith.constant dense<0xFF800000> : vector<16xf32>
    %252 = vector.multi_reduction <maximumf>, %251, %cst_166 [1] : vector<16x16xf32> to vector<16xf32>
    %253 = vector.shape_cast %252 : vector<16xf32> to vector<16x1xf32>
    %254 = vector.broadcast %253 : vector<16x1xf32> to vector<16x16xf32>
    %255 = arith.subf %251, %254 : vector<16x16xf32>
    %256 = math.exp %255 : vector<16x16xf32>
    %cst_167 = arith.constant dense<0.000000e+00> : vector<16xf32>
    %257 = vector.multi_reduction <add>, %256, %cst_167 [1] : vector<16x16xf32> to vector<16xf32>
    %258 = vector.shape_cast %257 : vector<16xf32> to vector<16x1xf32>
    %259 = tpu.reciprocal %258 {approx = true} : vector<16x1xf32> -> vector<16x1xf32>
    %260 = vector.broadcast %259 : vector<16x1xf32> to vector<16x16xf32>
    %261 = arith.mulf %256, %260 : vector<16x16xf32>
    %cst_168 = arith.constant dense<0.000000e+00> : vector<16x16xf32>
    %262 = tpu.matmul %261, %249, %cst_168 {dimension_numbers = #tpu.dot_dimension_numbers<[1], [0], [0], [1], [0, 0, 1, 1], [], []>} : vector<16x16xf32>, vector<16x16xf32>, vector<16x16xf32> -> vector<16x16xf32>
    %c3_169 = arith.constant 3 : index
    %c0_170 = arith.constant 0 : index
    %c0_171 = arith.constant 0 : index
    %263 = vector.load %arg11[%c3_169, %c0_170, %c0_171] : memref<4x16x32xf32, #tpu.memory_space<vmem>>, vector<1x16x32xf32>
    %264 = vector.shape_cast %263 : vector<1x16x32xf32> to vector<16x32xf32>
    %cst_172 = arith.constant dense<0.000000e+00> : vector<16x32xf32>
    %265 = tpu.matmul %262, %264, %cst_172 {dimension_numbers = #tpu.dot_dimension_numbers<[1], [0], [0], [1], [0, 0, 1, 1], [], []>} : vector<16x16xf32>, vector<16x32xf32>, vector<16x32xf32> -> vector<16x32xf32>
    %266 = arith.addf %226, %265 : vector<16x32xf32>
    %c1_173 = arith.constant 1 : index
    %c0_174 = arith.constant 0 : index
    %c0_175 = arith.constant 0 : index
    %267 = vector.load %arg12[%c1_173, %c0_174, %c0_175] : memref<2x1x32xf32, #tpu.memory_space<vmem>>, vector<1x1x32xf32>
    %268 = vector.shape_cast %267 : vector<1x1x32xf32> to vector<1x32xf32>
    %269 = vector.broadcast %268 : vector<1x32xf32> to vector<16x32xf32>
    %270 = arith.addf %266, %269 : vector<16x32xf32>
    %271 = arith.addf %270, %185 : vector<16x32xf32>
    %c1_176 = arith.constant 1 : index
    %c0_177 = arith.constant 0 : index
    %c0_178 = arith.constant 0 : index
    %272 = vector.load %arg13[%c1_176, %c0_177, %c0_178] : memref<2x1x32xf32, #tpu.memory_space<vmem>>, vector<1x1x32xf32>
    %273 = vector.shape_cast %272 : vector<1x1x32xf32> to vector<1x32xf32>
    %c1_179 = arith.constant 1 : index
    %c0_180 = arith.constant 0 : index
    %c0_181 = arith.constant 0 : index
    %274 = vector.load %arg14[%c1_179, %c0_180, %c0_181] : memref<2x1x32xf32, #tpu.memory_space<vmem>>, vector<1x1x32xf32>
    %275 = vector.shape_cast %274 : vector<1x1x32xf32> to vector<1x32xf32>
    %cst_182 = arith.constant dense<0.000000e+00> : vector<16xf32>
    %276 = vector.multi_reduction <add>, %271, %cst_182 [1] : vector<16x32xf32> to vector<16xf32>
    %277 = vector.shape_cast %276 : vector<16xf32> to vector<16x1xf32>
    %cst_183 = arith.constant 3.200000e+01 : f32
    %278 = vector.broadcast %cst_183 : f32 to vector<16x1xf32>
    %279 = arith.divf %277, %278 : vector<16x1xf32>
    %280 = vector.broadcast %279 : vector<16x1xf32> to vector<16x32xf32>
    %281 = arith.subf %271, %280 : vector<16x32xf32>
    %282 = arith.mulf %281, %281 : vector<16x32xf32>
    %cst_184 = arith.constant dense<0.000000e+00> : vector<16xf32>
    %283 = vector.multi_reduction <add>, %282, %cst_184 [1] : vector<16x32xf32> to vector<16xf32>
    %284 = vector.shape_cast %283 : vector<16xf32> to vector<16x1xf32>
    %cst_185 = arith.constant 3.200000e+01 : f32
    %285 = vector.broadcast %cst_185 : f32 to vector<16x1xf32>
    %286 = arith.divf %284, %285 : vector<16x1xf32>
    %cst_186 = arith.constant 9.99999974E-6 : f32
    %287 = vector.broadcast %cst_186 : f32 to vector<16x1xf32>
    %288 = arith.addf %286, %287 : vector<16x1xf32>
    %289 = math.rsqrt %288 : vector<16x1xf32>
    %290 = vector.broadcast %289 : vector<16x1xf32> to vector<16x32xf32>
    %291 = arith.mulf %281, %290 : vector<16x32xf32>
    %292 = vector.broadcast %273 : vector<1x32xf32> to vector<16x32xf32>
    %293 = arith.mulf %291, %292 : vector<16x32xf32>
    %294 = vector.broadcast %275 : vector<1x32xf32> to vector<16x32xf32>
    %295 = arith.addf %293, %294 : vector<16x32xf32>
    %c1_187 = arith.constant 1 : index
    %c0_188 = arith.constant 0 : index
    %c0_189 = arith.constant 0 : index
    %296 = vector.load %arg15[%c1_187, %c0_188, %c0_189] : memref<2x32x64xf32, #tpu.memory_space<vmem>>, vector<1x32x64xf32>
    %297 = vector.shape_cast %296 : vector<1x32x64xf32> to vector<32x64xf32>
    %cst_190 = arith.constant dense<0.000000e+00> : vector<16x64xf32>
    %298 = tpu.matmul %295, %297, %cst_190 {dimension_numbers = #tpu.dot_dimension_numbers<[1], [0], [0], [1], [0, 0, 1, 1], [], []>} : vector<16x32xf32>, vector<32x64xf32>, vector<16x64xf32> -> vector<16x64xf32>
    %c1_191 = arith.constant 1 : index
    %c0_192 = arith.constant 0 : index
    %c0_193 = arith.constant 0 : index
    %299 = vector.load %arg16[%c1_191, %c0_192, %c0_193] : memref<2x1x64xf32, #tpu.memory_space<vmem>>, vector<1x1x64xf32>
    %300 = vector.shape_cast %299 : vector<1x1x64xf32> to vector<1x64xf32>
    %301 = vector.broadcast %300 : vector<1x64xf32> to vector<16x64xf32>
    %302 = arith.addf %298, %301 : vector<16x64xf32>
    %cst_194 = arith.constant 5.000000e-01 : f32
    %303 = vector.broadcast %cst_194 : f32 to vector<16x64xf32>
    %304 = arith.mulf %303, %302 : vector<16x64xf32>
    %cst_195 = arith.constant 4.471500e-02 : f32
    %305 = vector.broadcast %cst_195 : f32 to vector<16x64xf32>
    %306 = arith.mulf %305, %302 : vector<16x64xf32>
    %307 = arith.mulf %306, %302 : vector<16x64xf32>
    %308 = arith.mulf %307, %302 : vector<16x64xf32>
    %309 = arith.addf %302, %308 : vector<16x64xf32>
    %cst_196 = arith.constant 0.797884583 : f32
    %310 = vector.broadcast %cst_196 : f32 to vector<16x64xf32>
    %311 = arith.mulf %310, %309 : vector<16x64xf32>
    %312 = math.tanh %311 : vector<16x64xf32>
    %cst_197 = arith.constant 1.000000e+00 : f32
    %313 = vector.broadcast %cst_197 : f32 to vector<16x64xf32>
    %314 = arith.addf %313, %312 : vector<16x64xf32>
    %315 = arith.mulf %304, %314 : vector<16x64xf32>
    %c1_198 = arith.constant 1 : index
    %c0_199 = arith.constant 0 : index
    %c0_200 = arith.constant 0 : index
    %316 = vector.load %arg17[%c1_198, %c0_199, %c0_200] : memref<2x64x32xf32, #tpu.memory_space<vmem>>, vector<1x64x32xf32>
    %317 = vector.shape_cast %316 : vector<1x64x32xf32> to vector<64x32xf32>
    %cst_201 = arith.constant dense<0.000000e+00> : vector<16x32xf32>
    %318 = tpu.matmul %315, %317, %cst_201 {dimension_numbers = #tpu.dot_dimension_numbers<[1], [0], [0], [1], [0, 0, 1, 1], [], []>} : vector<16x64xf32>, vector<64x32xf32>, vector<16x32xf32> -> vector<16x32xf32>
    %c1_202 = arith.constant 1 : index
    %c0_203 = arith.constant 0 : index
    %c0_204 = arith.constant 0 : index
    %319 = vector.load %arg18[%c1_202, %c0_203, %c0_204] : memref<2x1x32xf32, #tpu.memory_space<vmem>>, vector<1x1x32xf32>
    %320 = vector.shape_cast %319 : vector<1x1x32xf32> to vector<1x32xf32>
    %321 = vector.broadcast %320 : vector<1x32xf32> to vector<16x32xf32>
    %322 = arith.addf %318, %321 : vector<16x32xf32>
    %323 = arith.addf %322, %295 : vector<16x32xf32>
    %c1_205 = arith.constant 1 : index
    %c0_206 = arith.constant 0 : index
    %c0_207 = arith.constant 0 : index
    %324 = vector.load %arg19[%c1_205, %c0_206, %c0_207] : memref<2x1x32xf32, #tpu.memory_space<vmem>>, vector<1x1x32xf32>
    %325 = vector.shape_cast %324 : vector<1x1x32xf32> to vector<1x32xf32>
    %c1_208 = arith.constant 1 : index
    %c0_209 = arith.constant 0 : index
    %c0_210 = arith.constant 0 : index
    %326 = vector.load %arg20[%c1_208, %c0_209, %c0_210] : memref<2x1x32xf32, #tpu.memory_space<vmem>>, vector<1x1x32xf32>
    %327 = vector.shape_cast %326 : vector<1x1x32xf32> to vector<1x32xf32>
    %cst_211 = arith.constant dense<0.000000e+00> : vector<16xf32>
    %328 = vector.multi_reduction <add>, %323, %cst_211 [1] : vector<16x32xf32> to vector<16xf32>
    %329 = vector.shape_cast %328 : vector<16xf32> to vector<16x1xf32>
    %cst_212 = arith.constant 3.200000e+01 : f32
    %330 = vector.broadcast %cst_212 : f32 to vector<16x1xf32>
    %331 = arith.divf %329, %330 : vector<16x1xf32>
    %332 = vector.broadcast %331 : vector<16x1xf32> to vector<16x32xf32>
    %333 = arith.subf %323, %332 : vector<16x32xf32>
    %334 = arith.mulf %333, %333 : vector<16x32xf32>
    %cst_213 = arith.constant dense<0.000000e+00> : vector<16xf32>
    %335 = vector.multi_reduction <add>, %334, %cst_213 [1] : vector<16x32xf32> to vector<16xf32>
    %336 = vector.shape_cast %335 : vector<16xf32> to vector<16x1xf32>
    %cst_214 = arith.constant 3.200000e+01 : f32
    %337 = vector.broadcast %cst_214 : f32 to vector<16x1xf32>
    %338 = arith.divf %336, %337 : vector<16x1xf32>
    %cst_215 = arith.constant 9.99999974E-6 : f32
    %339 = vector.broadcast %cst_215 : f32 to vector<16x1xf32>
    %340 = arith.addf %338, %339 : vector<16x1xf32>
    %341 = math.rsqrt %340 : vector<16x1xf32>
    %342 = vector.broadcast %341 : vector<16x1xf32> to vector<16x32xf32>
    %343 = arith.mulf %333, %342 : vector<16x32xf32>
    %344 = vector.broadcast %325 : vector<1x32xf32> to vector<16x32xf32>
    %345 = arith.mulf %343, %344 : vector<16x32xf32>
    %346 = vector.broadcast %327 : vector<1x32xf32> to vector<16x32xf32>
    %347 = arith.addf %345, %346 : vector<16x32xf32>
    %348 = tpu.iota {dimensions = array<i32: 0>} : vector<2x16xi32>
    %349 = tpu.iota {dimensions = array<i32: 1>} : vector<2x16xi32>
    %c8_i32 = arith.constant 8 : i32
    %350 = vector.broadcast %c8_i32 : i32 to vector<2x16xi32>
    %351 = arith.muli %348, %350 : vector<2x16xi32>
    %352 = arith.cmpi eq, %349, %351 : vector<2x16xi32>
    %353 = arith.extui %352 : vector<2x16xi1> to vector<2x16xi32>
    %354 = arith.sitofp %353 : vector<2x16xi32> to vector<2x16xf32>
    %cst_216 = arith.constant dense<0.000000e+00> : vector<2x32xf32>
    %355 = tpu.matmul %354, %347, %cst_216 {dimension_numbers = #tpu.dot_dimension_numbers<[1], [0], [0], [1], [0, 0, 1, 1], [], []>} : vector<2x16xf32>, vector<16x32xf32>, vector<2x32xf32> -> vector<2x32xf32>
    %c0_217 = arith.constant 0 : index
    %c0_218 = arith.constant 0 : index
    %356 = vector.load %arg21[%c0_217, %c0_218] : memref<32x32xf32, #tpu.memory_space<vmem>>, vector<32x32xf32>
    %cst_219 = arith.constant dense<0.000000e+00> : vector<2x32xf32>
    %357 = tpu.matmul %355, %356, %cst_219 {dimension_numbers = #tpu.dot_dimension_numbers<[1], [0], [0], [1], [0, 0, 1, 1], [], []>} : vector<2x32xf32>, vector<32x32xf32>, vector<2x32xf32> -> vector<2x32xf32>
    %c0_220 = arith.constant 0 : index
    %c0_221 = arith.constant 0 : index
    %358 = vector.load %arg22[%c0_220, %c0_221] : memref<1x32xf32, #tpu.memory_space<vmem>>, vector<1x32xf32>
    %359 = vector.broadcast %358 : vector<1x32xf32> to vector<2x32xf32>
    %360 = arith.addf %357, %359 : vector<2x32xf32>
    %361 = math.tanh %360 : vector<2x32xf32>
    %c0_222 = arith.constant 0 : index
    %c0_223 = arith.constant 0 : index
    %362 = vector.load %arg23[%c0_222, %c0_223] : memref<32x2xf32, #tpu.memory_space<vmem>>, vector<32x2xf32>
    %cst_224 = arith.constant dense<0.000000e+00> : vector<2x2xf32>
    %363 = tpu.matmul %361, %362, %cst_224 {dimension_numbers = #tpu.dot_dimension_numbers<[1], [0], [0], [1], [0, 0, 1, 1], [], []>} : vector<2x32xf32>, vector<32x2xf32>, vector<2x2xf32> -> vector<2x2xf32>
    %c0_225 = arith.constant 0 : index
    %c0_226 = arith.constant 0 : index
    %364 = vector.load %arg24[%c0_225, %c0_226] : memref<1x2xf32, #tpu.memory_space<vmem>>, vector<1x2xf32>
    %365 = vector.broadcast %364 : vector<1x2xf32> to vector<2x2xf32>
    %366 = arith.addf %363, %365 : vector<2x2xf32>
    %c0_227 = arith.constant 0 : index
    %c0_228 = arith.constant 0 : index
    %367 = vector.load %arg2[%c0_227, %c0_228] : memref<2x1xi32, #tpu.memory_space<vmem>>, vector<2x1xi32>
    %cst_229 = arith.constant dense<0xFF800000> : vector<2xf32>
    %368 = vector.multi_reduction <maximumf>, %366, %cst_229 [1] : vector<2x2xf32> to vector<2xf32>
    %369 = vector.shape_cast %368 : vector<2xf32> to vector<2x1xf32>
    %370 = vector.broadcast %369 : vector<2x1xf32> to vector<2x2xf32>
    %371 = arith.subf %366, %370 : vector<2x2xf32>
    %372 = math.exp %371 : vector<2x2xf32>
    %cst_230 = arith.constant dense<0.000000e+00> : vector<2xf32>
    %373 = vector.multi_reduction <add>, %372, %cst_230 [1] : vector<2x2xf32> to vector<2xf32>
    %374 = vector.shape_cast %373 : vector<2xf32> to vector<2x1xf32>
    %375 = math.log %374 : vector<2x1xf32>
    %376 = vector.broadcast %375 : vector<2x1xf32> to vector<2x2xf32>
    %377 = arith.subf %371, %376 : vector<2x2xf32>
    %378 = tpu.iota {dimensions = array<i32: 1>} : vector<2x2xi32>
    %379 = vector.broadcast %367 : vector<2x1xi32> to vector<2x2xi32>
    %380 = arith.cmpi eq, %378, %379 : vector<2x2xi32>
    %381 = arith.extui %380 : vector<2x2xi1> to vector<2x2xi32>
    %382 = arith.sitofp %381 : vector<2x2xi32> to vector<2x2xf32>
    %383 = arith.mulf %377, %382 : vector<2x2xf32>
    %cst_231 = arith.constant dense<0.000000e+00> : vector<2xf32>
    %384 = vector.multi_reduction <add>, %383, %cst_231 [1] : vector<2x2xf32> to vector<2xf32>
    %385 = vector.shape_cast %384 : vector<2xf32> to vector<2x1xf32>
    %cst_232 = arith.constant 0.000000e+00 : f32
    %386 = vector.broadcast %cst_232 : f32 to vector<2x1xf32>
    %387 = arith.subf %386, %385 : vector<2x1xf32>
    %cst_233 = arith.constant dense<0.000000e+00> : vector<1xf32>
    %388 = vector.multi_reduction <add>, %387, %cst_233 [0] : vector<2x1xf32> to vector<1xf32>
    %389 = vector.shape_cast %388 : vector<1xf32> to vector<1x1xf32>
    %cst_234 = arith.constant 5.000000e-01 : f32
    %390 = vector.broadcast %cst_234 : f32 to vector<1x1xf32>
    %391 = arith.mulf %389, %390 : vector<1x1xf32>
    %c0_235 = arith.constant 0 : index
    %c0_236 = arith.constant 0 : index
    %392 = vector.load %arg25[%c0_235, %c0_236] : memref<1x1xf32, #tpu.memory_space<vmem>>, vector<1x1xf32>
    tpu.vector_store %arg25[%c0_235, %c0_236], %391 {strides = array<i32>} : memref<1x1xf32, #tpu.memory_space<vmem>>, vector<1x1xf32>,
    %393 = vector.broadcast %369 : vector<2x1xf32> to vector<2x2xf32>
    %394 = arith.cmpf oeq, %366, %393 : vector<2x2xf32>
    %c2_i32 = arith.constant 2 : i32
    %395 = vector.broadcast %c2_i32 : i32 to vector<2x2xi32>
    %396 = arith.select %394, %378, %395 : vector<2x2xi1>, vector<2x2xi32>
    %cst_237 = arith.constant dense<2147483647> : vector<2xi32>
    %397 = vector.multi_reduction <minsi>, %396, %cst_237 [1] : vector<2x2xi32> to vector<2xi32>
    %398 = vector.shape_cast %397 : vector<2xi32> to vector<2x1xi32>
    %399 = arith.cmpi eq, %398, %367 : vector<2x1xi32>
    %400 = arith.extui %399 : vector<2x1xi1> to vector<2x1xi32>
    %401 = arith.sitofp %400 : vector<2x1xi32> to vector<2x1xf32>
    %cst_238 = arith.constant dense<0.000000e+00> : vector<1xf32>
    %402 = vector.multi_reduction <add>, %401, %cst_238 [0] : vector<2x1xf32> to vector<1xf32>
    %403 = vector.shape_cast %402 : vector<1xf32> to vector<1x1xf32>
    %c0_239 = arith.constant 0 : index
    %c0_240 = arith.constant 0 : index
    %404 = vector.load %arg26[%c0_239, %c0_240] : memref<1x1xf32, #tpu.memory_space<vmem>>, vector<1x1xf32>
    tpu.vector_store %arg26[%c0_239, %c0_240], %403 {strides = array<i32>} : memref<1x1xf32, #tpu.memory_space<vmem>>, vector<1x1xf32>,
    return
  }
}

</mosaic_0001>

<llo_original>
// kernel: mul.8
$region0: #{mul.8}
  %s0 = inlined_call_operand.vmem [shape: f32[2,8], index: 0, kind: input, shape index: {}]
  %s1 = inlined_call_operand.vmem [shape: f32[16], index: 1, kind: output, shape index: {}]
  $region1: #{mul.8} parent=0
    #allocation0 [shape = 'u8[4096]{0}', space=vmem, size = 0x1000, scoped, tag = 'scoped mem for output reshape']
    #allocation1 [shape = 'u8[4096]{0}', space=vmem, size = 0x1000, scoped, tag = 'scoped mem for input reshape']
    %s3 = ssub.s32 4, 1
    %v4 = vld [vmem:[%s0] sm:%s3]
    %5 = vst [vmem:[#allocation1] sm:%s3] %v4
    %v6 = vld [vmem:[#allocation1] sm:$0x1]
    %vm7 = vcmask 64512
    %8 = vst.msk [vmem:[#allocation0] sm:$0x1] %vm7, %v6
    %s9 = scalar_lea.vmem [#allocation1], 1
    %v10 = vld [vmem:[%s9] sm:$0x1]
    %11 = vrot.lane.b32.xlu0 %v10, 8
    %v12 = vpop.permute.xlu0 %11
    %vm13 = vcmask 130112
    %14 = vst.msk [vmem:[#allocation0] sm:$0x1] %vm13, %v12
    %s16 = ssub.s32 2, 1
    %v17 = vld [vmem:[#allocation0] sm:%s16]
    %s19 = ssub.s32 2, 1
    %20 = vst [vmem:[%s1] sm:%s19] %v17

// kernel: _forward_core.1
$region0: #{_forward_core.1}
  #allocation0 [shape = 'u32[]', space=smem, size = 0x4, offset = 0x4, fixed_abs, tag = 'smem constant byte address 0x4 - core index']
  #allocation1 [shape = 'u32[72,128]{1,0:T(1,128)}', space=vmem, size = 0x9000, scoped, tag = 'internal scratch']
  %s0 = inlined_call_operand.vmem [shape: f32[16,32], index: 0, kind: input, shape index: {}]
  %s1 = inlined_call_operand.vmem [shape: f32[16,16], index: 1, kind: input, shape index: {}]
  %s2 = inlined_call_operand.vmem [shape: s32[2,1], index: 2, kind: input, shape index: {}]
  %s3 = inlined_call_operand.vmem [shape: f32[1,32], index: 3, kind: input, shape index: {}]
  %s4 = inlined_call_operand.vmem [shape: f32[1,32], index: 4, kind: input, shape index: {}]
  %s5 = inlined_call_operand.vmem [shape: f32[4,32,16], index: 5, kind: input, shape index: {}]
  %s6 = inlined_call_operand.vmem [shape: f32[4,1,16], index: 6, kind: input, shape index: {}]
  %s7 = inlined_call_operand.vmem [shape: f32[4,32,16], index: 7, kind: input, shape index: {}]
  %s8 = inlined_call_operand.vmem [shape: f32[4,1,16], index: 8, kind: input, shape index: {}]
  %s9 = inlined_call_operand.vmem [shape: f32[4,32,16], index: 9, kind: input, shape index: {}]
  %s10 = inlined_call_operand.vmem [shape: f32[4,1,16], index: 10, kind: input, shape index: {}]
  %s11 = inlined_call_operand.vmem [shape: f32[4,16,32], index: 11, kind: input, shape index: {}]
  %s12 = inlined_call_operand.vmem [shape: f32[2,1,32], index: 12, kind: input, shape index: {}]
  %s13 = inlined_call_operand.vmem [shape: f32[2,1,32], index: 13, kind: input, shape index: {}]
  %s14 = inlined_call_operand.vmem [shape: f32[2,1,32], index: 14, kind: input, shape index: {}]
  %s15 = inlined_call_operand.vmem [shape: f32[2,32,64], index: 15, kind: input, shape index: {}]
  %s16 = inlined_call_operand.vmem [shape: f32[2,1,64], index: 16, kind: input, shape index: {}]
  %s17 = inlined_call_operand.vmem [shape: f32[2,64,32], index: 17, kind: input, shape index: {}]
  %s18 = inlined_call_operand.vmem [shape: f32[2,1,32], index: 18, kind: input, shape index: {}]
  %s19 = inlined_call_operand.vmem [shape: f32[2,1,32], index: 19, kind: input, shape index: {}]
  %s20 = inlined_call_operand.vmem [shape: f32[2,1,32], index: 20, kind: input, shape index: {}]
  %s21 = inlined_call_operand.vmem [shape: f32[32,32], index: 21, kind: input, shape index: {}]
  %s22 = inlined_call_operand.vmem [shape: f32[1,32], index: 22, kind: input, shape index: {}]
  %s23 = inlined_call_operand.vmem [shape: f32[32,2], index: 23, kind: input, shape index: {}]
  %s24 = inlined_call_operand.vmem [shape: f32[1,2], index: 24, kind: input, shape index: {}]
  %s25 = inlined_call_operand.hbm [shape: f32[1,1], index: 25, kind: output, shape index: {0}]
  %s26 = inlined_call_operand.hbm [shape: f32[1,1], index: 26, kind: output, shape index: {1}]
  %27 = xla_tuple %s25, %s26
  %s28 = sld [smem:[#allocation0]]
  $region118: #{_forward_core.1} parent=0
    _
  %s30 = ssub.s32 1, %s28
  %s31 = scalar_select 0, %s30, %s28
  $region1: #{_forward_core.1} parent=0
    #allocation2 [shape = 'u8[512]{0}', space=vmem, size = 0x400, scoped, tag = 'output window, operand 0, single buffered']
    #allocation3 [shape = 's32[1]{0}', space=sflag, size = 0x4, scoped, tag = 'scoped memory for _forward_core.1']
    #allocation4 [shape = 'u8[512]{0}', space=vmem, size = 0x400, scoped, tag = 'output window, operand 1, single buffered']
    #allocation5 [shape = 's32[1]{0}', space=sflag, size = 0x4, scoped, tag = 'scoped memory for _forward_core.1']
    %32 = vsyncpa [#allocation3], 0
    %33 = vsyncpa [#allocation5], 0
    // Predicated region
    $region2: #{_forward_core.1} parent=1 // pred_check
      _
    $region3: #{_forward_core.1} parent=1 // pred_check_branch
      %35 = sbr.rel (0) target = $region5
    $region4: #{_forward_core.1} parent=1 // pred_region
      _
    $region5: #{_forward_core.1} parent=1 // pred_fallthru
      _
    // Predicated region
    $region6: #{_forward_core.1} parent=1 // pred_check
      _
    $region7: #{_forward_core.1} parent=1 // pred_check_branch
      %37 = sbr.rel (0) target = $region9
    $region8: #{_forward_core.1} parent=1 // pred_region
      _
    $region9: #{_forward_core.1} parent=1 // pred_fallthru
      _
    // Predicated region
    $region10: #{_forward_core.1} parent=1 // pred_check
      _
    $region11: #{_forward_core.1} parent=1 // pred_check_branch
      %39 = sbr.rel (0) target = $region13
    $region12: #{_forward_core.1} parent=1 // pred_region
      _
    $region13: #{_forward_core.1} parent=1 // pred_fallthru
      _
    // Predicated region
    $region14: #{_forward_core.1} parent=1 // pred_check
      _
    $region15: #{_forward_core.1} parent=1 // pred_check_branch
      %41 = sbr.rel (0) target = $region17
    $region16: #{_forward_core.1} parent=1 // pred_region
      _
    $region17: #{_forward_core.1} parent=1 // pred_fallthru
      _
    // Predicated region
    $region18: #{_forward_core.1} parent=1 // pred_check
      _
    $region19: #{_forward_core.1} parent=1 // pred_check_branch
      %43 = sbr.rel (0) target = $region21
    $region20: #{_forward_core.1} parent=1 // pred_region
      _
    $region21: #{_forward_core.1} parent=1 // pred_fallthru
      _
    // Predicated region
    $region22: #{_forward_core.1} parent=1 // pred_check
      _
    $region23: #{_forward_core.1} parent=1 // pred_check_branch
      %45 = sbr.rel (0) target = $region25
    $region24: #{_forward_core.1} parent=1 // pred_region
      _
    $region25: #{_forward_core.1} parent=1 // pred_fallthru
      _
    // Predicated region
    $region26: #{_forward_core.1} parent=1 // pred_check
      _
    $region27: #{_forward_core.1} parent=1 // pred_check_branch
      %47 = sbr.rel (0) target = $region29
    $region28: #{_forward_core.1} parent=1 // pred_region
      _
    $region29: #{_forward_core.1} parent=1 // pred_fallthru
      _
    // Predicated region
    $region30: #{_forward_core.1} parent=1 // pred_check
      _
    $region31: #{_forward_core.1} parent=1 // pred_check_branch
      %49 = sbr.rel (0) target = $region33
    $region32: #{_forward_core.1} parent=1 // pred_region
      _
    $region33: #{_forward_core.1} parent=1 // pred_fallthru
      _
    // Predicated region
    $region34: #{_forward_core.1} parent=1 // pred_check
      _
    $region35: #{_forward_core.1} parent=1 // pred_check_branch
      %51 = sbr.rel (0) target = $region37
    $region36: #{_forward_core.1} parent=1 // pred_region
      _
    $region37: #{_forward_core.1} parent=1 // pred_fallthru
      _
    // Predicated region
    $region38: #{_forward_core.1} parent=1 // pred_check
      _
    $region39: #{_forward_core.1} parent=1 // pred_check_branch
      %53 = sbr.rel (0) target = $region41
    $region40: #{_forward_core.1} parent=1 // pred_region
      _
    $region41: #{_forward_core.1} parent=1 // pred_fallthru
      _
    // Predicated region
    $region42: #{_forward_core.1} parent=1 // pred_check
      _
    $region43: #{_forward_core.1} parent=1 // pred_check_branch
      %55 = sbr.rel (0) target = $region45
    $region44: #{_forward_core.1} parent=1 // pred_region
      _
    $region45: #{_forward_core.1} parent=1 // pred_fallthru
      _
    // Predicated region
    $region46: #{_forward_core.1} parent=1 // pred_check
      _
    $region47: #{_forward_core.1} parent=1 // pred_check_branch
      %57 = sbr.rel (0) target = $region49
    $region48: #{_forward_core.1} parent=1 // pred_region
      _
    $region49: #{_forward_core.1} parent=1 // pred_fallthru
      _
    // Predicated region
    $region50: #{_forward_core.1} parent=1 // pred_check
      _
    $region51: #{_forward_core.1} parent=1 // pred_check_branch
      %59 = sbr.rel (0) target = $region53
    $region52: #{_forward_core.1} parent=1 // pred_region
      _
    $region53: #{_forward_core.1} parent=1 // pred_fallthru
      _
    // Predicated region
    $region54: #{_forward_core.1} parent=1 // pred_check
      _
    $region55: #{_forward_core.1} parent=1 // pred_check_branch
      %61 = sbr.rel (0) target = $region57
    $region56: #{_forward_core.1} parent=1 // pred_region
      _
    $region57: #{_forward_core.1} parent=1 // pred_fallthru
      _
    // Predicated region
    $region58: #{_forward_core.1} parent=1 // pred_check
      _
    $region59: #{_forward_core.1} parent=1 // pred_check_branch
      %63 = sbr.rel (0) target = $region61
    $region60: #{_forward_core.1} parent=1 // pred_region
      _
    $region61: #{_forward_core.1} parent=1 // pred_fallthru
      _
    // Predicated region
    $region62: #{_forward_core.1} parent=1 // pred_check
      _
    $region63: #{_forward_core.1} parent=1 // pred_check_branch
      %65 = sbr.rel (0) target = $region65
    $region64: #{_forward_core.1} parent=1 // pred_region
      _
    $region65: #{_forward_core.1} parent=1 // pred_fallthru
      _
    // Predicated region
    $region66: #{_forward_core.1} parent=1 // pred_check
      _
    $region67: #{_forward_core.1} parent=1 // pred_check_branch
      %67 = sbr.rel (0) target = $region69
    $region68: #{_forward_core.1} parent=1 // pred_region
      _
    $region69: #{_forward_core.1} parent=1 // pred_fallthru
      _
    // Predicated region
    $region70: #{_forward_core.1} parent=1 // pred_check
      _
    $region71: #{_forward_core.1} parent=1 // pred_check_branch
      %69 = sbr.rel (0) target = $region73
    $region72: #{_forward_core.1} parent=1 // pred_region
      _
    $region73: #{_forward_core.1} parent=1 // pred_fallthru
      _
    // Predicated region
    $region74: #{_forward_core.1} parent=1 // pred_check
      _
    $region75: #{_forward_core.1} parent=1 // pred_check_branch
      %71 = sbr.rel (0) target = $region77
    $region76: #{_forward_core.1} parent=1 // pred_region
      _
    $region77: #{_forward_core.1} parent=1 // pred_fallthru
      _
    // Predicated region
    $region78: #{_forward_core.1} parent=1 // pred_check
      _
    $region79: #{_forward_core.1} parent=1 // pred_check_branch
      %73 = sbr.rel (0) target = $region81
    $region80: #{_forward_core.1} parent=1 // pred_region
      _
    $region81: #{_forward_core.1} parent=1 // pred_fallthru
      _
    // Predicated region
    $region82: #{_forward_core.1} parent=1 // pred_check
      _
    $region83: #{_forward_core.1} parent=1 // pred_check_branch
      %75 = sbr.rel (0) target = $region85
    $region84: #{_forward_core.1} parent=1 // pred_region
      _
    $region85: #{_forward_core.1} parent=1 // pred_fallthru
      _
    // Predicated region
    $region86: #{_forward_core.1} parent=1 // pred_check
      _
    $region87: #{_forward_core.1} parent=1 // pred_check_branch
      %77 = sbr.rel (0) target = $region89
    $region88: #{_forward_core.1} parent=1 // pred_region
      _
    $region89: #{_forward_core.1} parent=1 // pred_fallthru
      _
    // Predicated region
    $region90: #{_forward_core.1} parent=1 // pred_check
      _
    $region91: #{_forward_core.1} parent=1 // pred_check_branch
      %79 = sbr.rel (0) target = $region93
    $region92: #{_forward_core.1} parent=1 // pred_region
      _
    $region93: #{_forward_core.1} parent=1 // pred_fallthru
      _
    // Predicated region
    $region94: #{_forward_core.1} parent=1 // pred_check
      _
    $region95: #{_forward_core.1} parent=1 // pred_check_branch
      %81 = sbr.rel (0) target = $region97
    $region96: #{_forward_core.1} parent=1 // pred_region
      _
    $region97: #{_forward_core.1} parent=1 // pred_fallthru
      _
    // Predicated region
    $region98: #{_forward_core.1} parent=1 // pred_check
      _
    $region99: #{_forward_core.1} parent=1 // pred_check_branch
      %83 = sbr.rel (0) target = $region101
    $region100: #{_forward_core.1} parent=1 // pred_region
      _
    $region101: #{_forward_core.1} parent=1 // pred_fallthru
      _
    %v84 = vld [vmem:[%s0] sm:$0xff]
    %v85 = vld [vmem:[%s0 + $0x8] sm:$0xff]
    %v86 = vld [vmem:[%s3] sm:$0x1]
    %v87 = vld [vmem:[%s4] sm:$0x1]
    %vm88 = vcmask 261120
    %v89 = vsel %vm88, %v84, 0.0
    %90 = vadd.xlane.f32.xlu0 %v89
    %v91 = vpop.xlane.xlu0 %90
    %v92 = vsel %vm88, %v85, 0.0
    %93 = vadd.xlane.f32.xlu0 %v92
    %v94 = vpop.xlane.xlu0 %93
    %v95 = vrcp.pop 32.0
    %v96 = vmul.f32 32.0, %v95
    %v97 = vsub.f32 1.0, %v96
    %v98 = vmul.f32 %v95, %v97
    %v99 = vadd.f32 %v95, %v98
    %vm100 = vweird.f32 %v95
    %v101 = vsel %vm100, %v95, %v99
    %v102 = vmul.f32 %v91, %v101
    %v103 = vmul.f32 %v94, %v101
    %v104 = vsub.f32 %v84, %v102
    %v105 = vsub.f32 %v85, %v103
    %v106 = vmul.f32 %v104, %v104
    %v107 = vmul.f32 %v105, %v105
    %v108 = vsel %vm88, %v106, 0.0
    %109 = vadd.xlane.f32.xlu0 %v108
    %v110 = vpop.xlane.xlu0 %109
    %v111 = vsel %vm88, %v107, 0.0
    %112 = vadd.xlane.f32.xlu0 %v111
    %v113 = vpop.xlane.xlu0 %112
    %v114 = vmul.f32 %v110, %v101
    %v115 = vmul.f32 %v113, %v101
    %v116 = vadd.f32 %v114, 1e-05
    %v117 = vadd.f32 %v115, 1e-05
    %v118 = vrsqrt.pop %v116
    %v119 = vmul.f32 %v118, %v116
    %v120 = vmul.f32 %v119, %v118
    %v121 = vmul.f32 0.5, %v120
    %v122 = vsub.f32 1.5, %v121
    %v123 = vmul.f32 %v118, %v122
    %vm124 = vweird.f32 %v116
    %vm125 = vweird.f32 %v118
    %vm126 = vmor %vm124, %vm125
    %v127 = vsel %vm126, %v118, %v123
    %v128 = vrsqrt.pop %v117
    %v129 = vmul.f32 %v128, %v117
    %v130 = vmul.f32 %v129, %v128
    %v131 = vmul.f32 0.5, %v130
    %v132 = vsub.f32 1.5, %v131
    %v133 = vmul.f32 %v128, %v132
    %vm134 = vweird.f32 %v117
    %vm135 = vweird.f32 %v128
    %vm136 = vmor %vm134, %vm135
    %v137 = vsel %vm136, %v128, %v133
    %v138 = vmul.f32 %v104, %v127
    %v139 = vmul.f32 %v105, %v137
    %v141 = vperm.slane %v86, 0
    %v143 = vmul.f32 %v138, %v141
    %v144 = vmul.f32 %v139, %v141
    %v146 = vperm.slane %v87, 0
    %v148 = vadd.f32 %v143, %v146
    %v149 = vadd.f32 %v144, %v146
    %v150 = vld [vmem:[%s1] sm:$0xff]
    %v151 = vld [vmem:[%s1 + $0x8] sm:$0xff]
    %v152 = vld [vmem:[%s5] sm:$0xff]
    %v153 = vld [vmem:[%s5 + $0x8] sm:$0xff]
    %v154 = vld [vmem:[%s5 + $0x10] sm:$0xff]
    %v155 = vld [vmem:[%s5 + $0x18] sm:$0xff]
    %v156 = vld [vmem:[%s6] sm:$0x1]
    %v158 = vperm.slane %v156, 0
    %v161 = vsel %vm88, %v148, 0
    %v164 = vsel %vm88, %v149, 0
    %166 = vmatpush.msra.mxu0 0.0
    %167 = vmatpush.msra.mxu0 0.0
    %168 = vmatpush.msra.mxu0 0.0
    %169 = vmatpush.msra.mxu0 0.0
    %170 = vmatpush.msra.mxu0 0.0
    %171 = vmatpush.msra.mxu0 0.0
    %172 = vmatpush.msra.mxu0 0.0
    %173 = vmatpush.msra.mxu0 0.0
    %174 = vmatpush.msra.mxu0 0.0
    %175 = vmatpush.msra.mxu0 0.0
    %176 = vmatpush.msra.mxu0 0.0
    %177 = vmatpush.msra.mxu0 0.0
    %178 = vmatpush.msra.mxu0 %v155
    %179 = vmatpush.msra.mxu0 %v154
    %180 = vmatpush.msra.mxu0 %v153
    %181 = vmatpush.msra.mxu0 %v152
    %182 = vmatmul.f32.gmra.mxu0 %v161
    %v183 = vpop.f32.mrf.mxu0
    %v184 = vadd.f32 %v158, %v183
    %185 = vmatmul.f32.gmra.mxu0 %v164
    %v186 = vpop.f32.mrf.mxu0
    %v187 = vadd.f32 %v158, %v186
    %188 = vdwg.mxu0
    %v189 = vmul.f32 %v184, 0.25
    %v190 = vmul.f32 %v187, 0.25
    %v191 = vld [vmem:[%s7] sm:$0xff]
    %v192 = vld [vmem:[%s7 + $0x8] sm:$0xff]
    %v193 = vld [vmem:[%s7 + $0x10] sm:$0xff]
    %v194 = vld [vmem:[%s7 + $0x18] sm:$0xff]
    %v195 = vld [vmem:[%s8] sm:$0x1]
    %v197 = vperm.slane %v195, 0
    %199 = vmatpush.msra.mxu0 0.0
    %200 = vmatpush.msra.mxu0 0.0
    %201 = vmatpush.msra.mxu0 0.0
    %202 = vmatpush.msra.mxu0 0.0
    %203 = vmatpush.msra.mxu0 0.0
    %204 = vmatpush.msra.mxu0 0.0
    %205 = vmatpush.msra.mxu0 0.0
    %206 = vmatpush.msra.mxu0 0.0
    %207 = vmatpush.msra.mxu0 0.0
    %208 = vmatpush.msra.mxu0 0.0
    %209 = vmatpush.msra.mxu0 0.0
    %210 = vmatpush.msra.mxu0 0.0
    %211 = vmatpush.msra.mxu0 %v194
    %212 = vmatpush.msra.mxu0 %v193
    %213 = vmatpush.msra.mxu0 %v192
    %214 = vmatpush.msra.mxu0 %v191
    %215 = vmatmul.f32.gmra.mxu0 %v161
    %v216 = vpop.f32.mrf.mxu0
    %v217 = vadd.f32 %v197, %v216
    %218 = vmatmul.f32.gmra.mxu0 %v164
    %v219 = vpop.f32.mrf.mxu0
    %v220 = vadd.f32 %v197, %v219
    %221 = vdwg.mxu0
    %v222 = vld [vmem:[%s9] sm:$0xff]
    %v223 = vld [vmem:[%s9 + $0x8] sm:$0xff]
    %v224 = vld [vmem:[%s9 + $0x10] sm:$0xff]
    %v225 = vld [vmem:[%s9 + $0x18] sm:$0xff]
    %v226 = vld [vmem:[%s10] sm:$0x1]
    %v228 = vperm.slane %v226, 0
    %230 = vmatpush.msra.mxu0 0.0
    %231 = vmatpush.msra.mxu0 0.0
    %232 = vmatpush.msra.mxu0 0.0
    %233 = vmatpush.msra.mxu0 0.0
    %234 = vmatpush.msra.mxu0 0.0
    %235 = vmatpush.msra.mxu0 0.0
    %236 = vmatpush.msra.mxu0 0.0
    %237 = vmatpush.msra.mxu0 0.0
    %238 = vmatpush.msra.mxu0 0.0
    %239 = vmatpush.msra.mxu0 0.0
    %240 = vmatpush.msra.mxu0 0.0
    %241 = vmatpush.msra.mxu0 0.0
    %242 = vmatpush.msra.mxu0 %v225
    %243 = vmatpush.msra.mxu0 %v224
    %244 = vmatpush.msra.mxu0 %v223
    %245 = vmatpush.msra.mxu0 %v222
    %246 = vmatmul.f32.gmra.mxu0 %v161
    %v247 = vpop.f32.mrf.mxu0
    %v248 = vadd.f32 %v228, %v247
    %249 = vmatmul.f32.gmra.mxu0 %v164
    %v250 = vpop.f32.mrf.mxu0
    %v251 = vadd.f32 %v228, %v250
    %252 = vdwg.mxu0
    %vm253 = vcmask 130048
    %v255 = vsel %vm253, %v189, 0
    %v258 = vsel %vm253, %v190, 0
    %v261 = vsel %vm253, %v217, 0
    %v264 = vsel %vm253, %v220, 0
    %266 = vmatpush.xpose.msra.mxu0 0.0
    %267 = vmatpush.xpose.msra.mxu0 0.0
    %268 = vmatpush.xpose.msra.mxu0 0.0
    %269 = vmatpush.xpose.msra.mxu0 0.0
    %270 = vmatpush.xpose.msra.mxu0 0.0
    %271 = vmatpush.xpose.msra.mxu0 0.0
    %272 = vmatpush.xpose.msra.mxu0 0.0
    %273 = vmatpush.xpose.msra.mxu0 0.0
    %274 = vmatpush.xpose.msra.mxu0 0.0
    %275 = vmatpush.xpose.msra.mxu0 0.0
    %276 = vmatpush.xpose.msra.mxu0 0.0
    %277 = vmatpush.xpose.msra.mxu0 0.0
    %278 = vmatpush.xpose.msra.mxu0 0.0
    %279 = vmatpush.xpose.msra.mxu0 0.0
    %280 = vmatpush.xpose.msra.mxu0 %v264
    %281 = vmatpush.xpose.msra.mxu0 %v261
    %282 = vmatmul.f32.gmra.mxu0 %v255
    %v283 = vpop.f32.mrf.mxu0
    %v284 = vadd.f32 %v150, %v283
    %285 = vmatmul.f32.gmra.mxu0 %v258
    %v286 = vpop.f32.mrf.mxu0
    %v287 = vadd.f32 %v151, %v286
    %288 = vdwg.mxu0
    %v289 = vsel %vm253, %v284, -inf
    %290 = vmax.xlane.f32.xlu0 %v289
    %v291 = vpop.xlane.xlu0 %290
    %v292 = vsel %vm253, %v287, -inf
    %293 = vmax.xlane.f32.xlu0 %v292
    %v294 = vpop.xlane.xlu0 %293
    %v295 = vsub.f32 %v284, %v291
    %v296 = vsub.f32 %v287, %v294
    %v297 = vmul.f32 %v295, 1.442695
    %v298 = vpow.pop %v297
    %v299 = vmul.f32 %v296, 1.442695
    %v300 = vpow.pop %v299
    %v301 = vsel %vm253, %v298, 0.0
    %302 = vadd.xlane.f32.xlu0 %v301
    %v303 = vpop.xlane.xlu0 %302
    %v304 = vsel %vm253, %v300, 0.0
    %305 = vadd.xlane.f32.xlu0 %v304
    %v306 = vpop.xlane.xlu0 %305
    %v307 = vrcp.pop %v303
    %v308 = vrcp.pop %v306
    %v309 = vmul.f32 %v298, %v307
    %v310 = vmul.f32 %v300, %v308
    %v312 = vsel %vm253, %v309, 0
    %v315 = vsel %vm253, %v310, 0
    %317 = vmatpush.msra.mxu0 0.0
    %318 = vmatpush.msra.mxu0 0.0
    %319 = vmatpush.msra.mxu0 0.0
    %320 = vmatpush.msra.mxu0 0.0
    %321 = vmatpush.msra.mxu0 0.0
    %322 = vmatpush.msra.mxu0 0.0
    %323 = vmatpush.msra.mxu0 0.0
    %324 = vmatpush.msra.mxu0 0.0
    %325 = vmatpush.msra.mxu0 0.0
    %326 = vmatpush.msra.mxu0 0.0
    %327 = vmatpush.msra.mxu0 0.0
    %328 = vmatpush.msra.mxu0 0.0
    %329 = vmatpush.msra.mxu0 0.0
    %330 = vmatpush.msra.mxu0 0.0
    %331 = vmatpush.msra.mxu0 %v251
    %332 = vmatpush.msra.mxu0 %v248
    %333 = vmatmul.f32.gmra.mxu0 %v312
    %v334 = vpop.f32.mrf.mxu0
    %v335 = vadd.f32 0.0, %v334
    %336 = vmatmul.f32.gmra.mxu0 %v315
    %v337 = vpop.f32.mrf.mxu0
    %v338 = vadd.f32 0.0, %v337
    %339 = vdwg.mxu0
    %v340 = vld [vmem:[%s11] sm:$0xff]
    %v341 = vld [vmem:[%s11 + $0x8] sm:$0xff]
    %s342 = scalar_lea.vmem %s5, 32
    %v343 = vld [vmem:[%s342] sm:$0xff]
    %v344 = vld [vmem:[%s342 + $0x8] sm:$0xff]
    %v345 = vld [vmem:[%s342 + $0x10] sm:$0xff]
    %v346 = vld [vmem:[%s342 + $0x18] sm:$0xff]
    %s347 = scalar_lea.vmem %s6, 1
    %v348 = vld [vmem:[%s347] sm:$0x1]
    %v350 = vperm.slane %v348, 0
    %352 = vmatpush.msra.mxu0 0.0
    %353 = vmatpush.msra.mxu0 0.0
    %354 = vmatpush.msra.mxu0 0.0
    %355 = vmatpush.msra.mxu0 0.0
    %356 = vmatpush.msra.mxu0 0.0
    %357 = vmatpush.msra.mxu0 0.0
    %358 = vmatpush.msra.mxu0 0.0
    %359 = vmatpush.msra.mxu0 0.0
    %360 = vmatpush.msra.mxu0 0.0
    %361 = vmatpush.msra.mxu0 0.0
    %362 = vmatpush.msra.mxu0 0.0
    %363 = vmatpush.msra.mxu0 0.0
    %364 = vmatpush.msra.mxu0 %v346
    %365 = vmatpush.msra.mxu0 %v345
    %366 = vmatpush.msra.mxu0 %v344
    %367 = vmatpush.msra.mxu0 %v343
    %368 = vmatmul.f32.gmra.mxu0 %v161
    %v369 = vpop.f32.mrf.mxu0
    %v370 = vadd.f32 %v350, %v369
    %371 = vmatmul.f32.gmra.mxu0 %v164
    %v372 = vpop.f32.mrf.mxu0
    %v373 = vadd.f32 %v350, %v372
    %374 = vdwg.mxu0
    %v375 = vmul.f32 %v370, 0.25
    %v376 = vmul.f32 %v373, 0.25
    %s377 = scalar_lea.vmem %s7, 32
    %v378 = vld [vmem:[%s377] sm:$0xff]
    %v379 = vld [vmem:[%s377 + $0x8] sm:$0xff]
    %v380 = vld [vmem:[%s377 + $0x10] sm:$0xff]
    %v381 = vld [vmem:[%s377 + $0x18] sm:$0xff]
    %s382 = scalar_lea.vmem %s8, 1
    %v383 = vld [vmem:[%s382] sm:$0x1]
    %v385 = vperm.slane %v383, 0
    %387 = vmatpush.msra.mxu0 0.0
    %388 = vmatpush.msra.mxu0 0.0
    %389 = vmatpush.msra.mxu0 0.0
    %390 = vmatpush.msra.mxu0 0.0
    %391 = vmatpush.msra.mxu0 0.0
    %392 = vmatpush.msra.mxu0 0.0
    %393 = vmatpush.msra.mxu0 0.0
    %394 = vmatpush.msra.mxu0 0.0
    %395 = vmatpush.msra.mxu0 0.0
    %396 = vmatpush.msra.mxu0 0.0
    %397 = vmatpush.msra.mxu0 0.0
    %398 = vmatpush.msra.mxu0 0.0
    %399 = vmatpush.msra.mxu0 %v381
    %400 = vmatpush.msra.mxu0 %v380
    %401 = vmatpush.msra.mxu0 %v379
    %402 = vmatpush.msra.mxu0 %v378
    %403 = vmatmul.f32.gmra.mxu0 %v161
    %v404 = vpop.f32.mrf.mxu0
    %v405 = vadd.f32 %v385, %v404
    %406 = vmatmul.f32.gmra.mxu0 %v164
    %v407 = vpop.f32.mrf.mxu0
    %v408 = vadd.f32 %v385, %v407
    %409 = vdwg.mxu0
    %s410 = scalar_lea.vmem %s9, 32
    %v411 = vld [vmem:[%s410] sm:$0xff]
    %v412 = vld [vmem:[%s410 + $0x8] sm:$0xff]
    %v413 = vld [vmem:[%s410 + $0x10] sm:$0xff]
    %v414 = vld [vmem:[%s410 + $0x18] sm:$0xff]
    %s415 = scalar_lea.vmem %s10, 1
    %v416 = vld [vmem:[%s415] sm:$0x1]
    %v418 = vperm.slane %v416, 0
    %420 = vmatpush.msra.mxu0 0.0
    %421 = vmatpush.msra.mxu0 0.0
    %422 = vmatpush.msra.mxu0 0.0
    %423 = vmatpush.msra.mxu0 0.0
    %424 = vmatpush.msra.mxu0 0.0
    %425 = vmatpush.msra.mxu0 0.0
    %426 = vmatpush.msra.mxu0 0.0
    %427 = vmatpush.msra.mxu0 0.0
    %428 = vmatpush.msra.mxu0 0.0
    %429 = vmatpush.msra.mxu0 0.0
    %430 = vmatpush.msra.mxu0 0.0
    %431 = vmatpush.msra.mxu0 0.0
    %432 = vmatpush.msra.mxu0 %v414
    %433 = vmatpush.msra.mxu0 %v413
    %434 = vmatpush.msra.mxu0 %v412
    %435 = vmatpush.msra.mxu0 %v411
    %436 = vmatmul.f32.gmra.mxu0 %v161
    %v437 = vpop.f32.mrf.mxu0
    %v438 = vadd.f32 %v418, %v437
    %439 = vmatmul.f32.gmra.mxu0 %v164
    %v440 = vpop.f32.mrf.mxu0
    %v441 = vadd.f32 %v418, %v440
    %442 = vdwg.mxu0
    %v444 = vsel %vm253, %v375, 0
    %v447 = vsel %vm253, %v376, 0
    %v450 = vsel %vm253, %v405, 0
    %v453 = vsel %vm253, %v408, 0
    %455 = vmatpush.xpose.msra.mxu0 0.0
    %456 = vmatpush.xpose.msra.mxu0 0.0
    %457 = vmatpush.xpose.msra.mxu0 0.0
    %458 = vmatpush.xpose.msra.mxu0 0.0
    %459 = vmatpush.xpose.msra.mxu0 0.0
    %460 = vmatpush.xpose.msra.mxu0 0.0
    %461 = vmatpush.xpose.msra.mxu0 0.0
    %462 = vmatpush.xpose.msra.mxu0 0.0
    %463 = vmatpush.xpose.msra.mxu0 0.0
    %464 = vmatpush.xpose.msra.mxu0 0.0
    %465 = vmatpush.xpose.msra.mxu0 0.0
    %466 = vmatpush.xpose.msra.mxu0 0.0
    %467 = vmatpush.xpose.msra.mxu0 0.0
    %468 = vmatpush.xpose.msra.mxu0 0.0
    %469 = vmatpush.xpose.msra.mxu0 %v453
    %470 = vmatpush.xpose.msra.mxu0 %v450
    %471 = vmatmul.f32.gmra.mxu0 %v444
    %v472 = vpop.f32.mrf.mxu0
    %v473 = vadd.f32 %v150, %v472
    %474 = vmatmul.f32.gmra.mxu0 %v447
    %v475 = vpop.f32.mrf.mxu0
    %v476 = vadd.f32 %v151, %v475
    %477 = vdwg.mxu0
    %v478 = vsel %vm253, %v473, -inf
    %479 = vmax.xlane.f32.xlu0 %v478
    %v480 = vpop.xlane.xlu0 %479
    %v481 = vsel %vm253, %v476, -inf
    %482 = vmax.xlane.f32.xlu0 %v481
    %v483 = vpop.xlane.xlu0 %482
    %v484 = vsub.f32 %v473, %v480
    %v485 = vsub.f32 %v476, %v483
    %v486 = vmul.f32 %v484, 1.442695
    %v487 = vpow.pop %v486
    %v488 = vmul.f32 %v485, 1.442695
    %v489 = vpow.pop %v488
    %v490 = vsel %vm253, %v487, 0.0
    %491 = vadd.xlane.f32.xlu0 %v490
    %v492 = vpop.xlane.xlu0 %491
    %v493 = vsel %vm253, %v489, 0.0
    %494 = vadd.xlane.f32.xlu0 %v493
    %v495 = vpop.xlane.xlu0 %494
    %v496 = vrcp.pop %v492
    %v497 = vrcp.pop %v495
    %v498 = vmul.f32 %v487, %v496
    %v499 = vmul.f32 %v489, %v497
    %v501 = vsel %vm253, %v498, 0
    %v504 = vsel %vm253, %v499, 0
    %506 = vmatpush.msra.mxu0 0.0
    %507 = vmatpush.msra.mxu0 0.0
    %508 = vmatpush.msra.mxu0 0.0
    %509 = vmatpush.msra.mxu0 0.0
    %510 = vmatpush.msra.mxu0 0.0
    %511 = vmatpush.msra.mxu0 0.0
    %512 = vmatpush.msra.mxu0 0.0
    %513 = vmatpush.msra.mxu0 0.0
    %514 = vmatpush.msra.mxu0 0.0
    %515 = vmatpush.msra.mxu0 0.0
    %516 = vmatpush.msra.mxu0 0.0
    %517 = vmatpush.msra.mxu0 0.0
    %518 = vmatpush.msra.mxu0 0.0
    %519 = vmatpush.msra.mxu0 0.0
    %520 = vmatpush.msra.mxu0 %v441
    %521 = vmatpush.msra.mxu0 %v438
    %522 = vmatmul.f32.gmra.mxu0 %v501
    %v523 = vpop.f32.mrf.mxu0
    %v524 = vadd.f32 0.0, %v523
    %525 = vmatmul.f32.gmra.mxu0 %v504
    %v526 = vpop.f32.mrf.mxu0
    %v527 = vadd.f32 0.0, %v526
    %528 = vdwg.mxu0
    %s529 = scalar_lea.vmem %s11, 16
    %v530 = vld [vmem:[%s529] sm:$0xff]
    %v531 = vld [vmem:[%s529 + $0x8] sm:$0xff]
    %v533 = vsel %vm253, %v524, 0
    %v536 = vsel %vm253, %v527, 0
    %538 = vmatpush.msra.mxu0 0.0
    %539 = vmatpush.msra.mxu0 0.0
    %540 = vmatpush.msra.mxu0 0.0
    %541 = vmatpush.msra.mxu0 0.0
    %542 = vmatpush.msra.mxu0 0.0
    %543 = vmatpush.msra.mxu0 0.0
    %544 = vmatpush.msra.mxu0 0.0
    %545 = vmatpush.msra.mxu0 0.0
    %546 = vmatpush.msra.mxu0 0.0
    %547 = vmatpush.msra.mxu0 0.0
    %548 = vmatpush.msra.mxu0 0.0
    %549 = vmatpush.msra.mxu0 0.0
    %550 = vmatpush.msra.mxu0 0.0
    %551 = vmatpush.msra.mxu0 0.0
    %552 = vmatpush.msra.mxu0 %v531
    %553 = vmatpush.msra.mxu0 %v530
    %554 = vmatmul.f32.gmra.mxu0 %v533
    %v555 = vpop.f32.mrf.mxu0
    %v556 = vadd.f32 0.0, %v555
    %557 = vmatmul.f32.gmra.mxu0 %v536
    %v558 = vpop.f32.mrf.mxu0
    %v559 = vadd.f32 0.0, %v558
    %560 = vdwg.mxu0
    %v562 = vsel %vm253, %v335, 0
    %v565 = vsel %vm253, %v338, 0
    %567 = vmatpush.msra.mxu0 0.0
    %568 = vmatpush.msra.mxu0 0.0
    %569 = vmatpush.msra.mxu0 0.0
    %570 = vmatpush.msra.mxu0 0.0
    %571 = vmatpush.msra.mxu0 0.0
    %572 = vmatpush.msra.mxu0 0.0
    %573 = vmatpush.msra.mxu0 0.0
    %574 = vmatpush.msra.mxu0 0.0
    %575 = vmatpush.msra.mxu0 0.0
    %576 = vmatpush.msra.mxu0 0.0
    %577 = vmatpush.msra.mxu0 0.0
    %578 = vmatpush.msra.mxu0 0.0
    %579 = vmatpush.msra.mxu0 0.0
    %580 = vmatpush.msra.mxu0 0.0
    %581 = vmatpush.msra.mxu0 %v341
    %582 = vmatpush.msra.mxu0 %v340
    %583 = vmatmul.f32.gmra.mxu0 %v562
    %v584 = vpop.f32.mrf.mxu0
    %v585 = vadd.f32 %v556, %v584
    %586 = vmatmul.f32.gmra.mxu0 %v565
    %v587 = vpop.f32.mrf.mxu0
    %v588 = vadd.f32 %v559, %v587
    %589 = vdwg.mxu0
    %v590 = vld [vmem:[%s12] sm:$0x1]
    %v592 = vperm.slane %v590, 0
    %v594 = vadd.f32 %v585, %v592
    %v595 = vadd.f32 %v588, %v592
    %v596 = vadd.f32 %v594, %v148
    %v597 = vadd.f32 %v595, %v149
    %v598 = vld [vmem:[%s13] sm:$0x1]
    %v599 = vld [vmem:[%s14] sm:$0x1]
    %v600 = vsel %vm88, %v596, 0.0
    %601 = vadd.xlane.f32.xlu0 %v600
    %v602 = vpop.xlane.xlu0 %601
    %v603 = vsel %vm88, %v597, 0.0
    %604 = vadd.xlane.f32.xlu0 %v603
    %v605 = vpop.xlane.xlu0 %604
    %v606 = vmul.f32 %v602, %v101
    %v607 = vmul.f32 %v605, %v101
    %v608 = vsub.f32 %v596, %v606
    %v609 = vsub.f32 %v597, %v607
    %v610 = vmul.f32 %v608, %v608
    %v611 = vmul.f32 %v609, %v609
    %v612 = vsel %vm88, %v610, 0.0
    %613 = vadd.xlane.f32.xlu0 %v612
    %v614 = vpop.xlane.xlu0 %613
    %v615 = vsel %vm88, %v611, 0.0
    %616 = vadd.xlane.f32.xlu0 %v615
    %v617 = vpop.xlane.xlu0 %616
    %v618 = vmul.f32 %v614, %v101
    %v619 = vmul.f32 %v617, %v101
    %v620 = vadd.f32 %v618, 1e-05
    %v621 = vadd.f32 %v619, 1e-05
    %v622 = vrsqrt.pop %v620
    %v623 = vmul.f32 %v622, %v620
    %v624 = vmul.f32 %v623, %v622
    %v625 = vmul.f32 0.5, %v624
    %v626 = vsub.f32 1.5, %v625
    %v627 = vmul.f32 %v622, %v626
    %vm628 = vweird.f32 %v620
    %vm629 = vweird.f32 %v622
    %vm630 = vmor %vm628, %vm629
    %v631 = vsel %vm630, %v622, %v627
    %v632 = vrsqrt.pop %v621
    %v633 = vmul.f32 %v632, %v621
    %v634 = vmul.f32 %v633, %v632
    %v635 = vmul.f32 0.5, %v634
    %v636 = vsub.f32 1.5, %v635
    %v637 = vmul.f32 %v632, %v636
    %vm638 = vweird.f32 %v621
    %vm639 = vweird.f32 %v632
    %vm640 = vmor %vm638, %vm639
    %v641 = vsel %vm640, %v632, %v637
    %v642 = vmul.f32 %v608, %v631
    %v643 = vmul.f32 %v609, %v641
    %v645 = vperm.slane %v598, 0
    %v647 = vmul.f32 %v642, %v645
    %v648 = vmul.f32 %v643, %v645
    %v650 = vperm.slane %v599, 0
    %v652 = vadd.f32 %v647, %v650
    %v653 = vadd.f32 %v648, %v650
    %v654 = vld [vmem:[%s15] sm:$0xff]
    %v655 = vld [vmem:[%s15 + $0x8] sm:$0xff]
    %v656 = vld [vmem:[%s15 + $0x10] sm:$0xff]
    %v657 = vld [vmem:[%s15 + $0x18] sm:$0xff]
    %v658 = vld [vmem:[%s16] sm:$0x1]
    %v660 = vperm.slane %v658, 0
    %v663 = vsel %vm88, %v652, 0
    %v666 = vsel %vm88, %v653, 0
    %668 = vmatpush.msra.mxu0 0.0
    %669 = vmatpush.msra.mxu0 0.0
    %670 = vmatpush.msra.mxu0 0.0
    %671 = vmatpush.msra.mxu0 0.0
    %672 = vmatpush.msra.mxu0 0.0
    %673 = vmatpush.msra.mxu0 0.0
    %674 = vmatpush.msra.mxu0 0.0
    %675 = vmatpush.msra.mxu0 0.0
    %676 = vmatpush.msra.mxu0 0.0
    %677 = vmatpush.msra.mxu0 0.0
    %678 = vmatpush.msra.mxu0 0.0
    %679 = vmatpush.msra.mxu0 0.0
    %680 = vmatpush.msra.mxu0 %v657
    %681 = vmatpush.msra.mxu0 %v656
    %682 = vmatpush.msra.mxu0 %v655
    %683 = vmatpush.msra.mxu0 %v654
    %684 = vmatmul.f32.gmra.mxu0 %v663
    %v685 = vpop.f32.mrf.mxu0
    %v686 = vadd.f32 %v660, %v685
    %687 = vmatmul.f32.gmra.mxu0 %v666
    %v688 = vpop.f32.mrf.mxu0
    %v689 = vadd.f32 %v660, %v688
    %690 = vdwg.mxu0
    %v691 = vmul.f32 %v686, 0.5
    %v692 = vmul.f32 %v689, 0.5
    %v693 = vmul.f32 %v686, 0.044715
    %v694 = vmul.f32 %v689, 0.044715
    %v695 = vmul.f32 %v693, %v686
    %v696 = vmul.f32 %v694, %v689
    %v697 = vmul.f32 %v695, %v686
    %v698 = vmul.f32 %v696, %v689
    %v699 = vadd.f32 %v686, %v697
    %v700 = vadd.f32 %v689, %v698
    %v701 = vmul.f32 %v699, 0.7978846
    %v702 = vmul.f32 %v700, 0.7978846
    %v703 = vtanh.pop %v701
    %v704 = vtanh.pop %v702
    %v705 = vadd.f32 %v703, 1.0
    %v706 = vadd.f32 %v704, 1.0
    %v707 = vmul.f32 %v691, %v705
    %v708 = vmul.f32 %v692, %v706
    %v709 = vld [vmem:[%s17] sm:$0xff]
    %v710 = vld [vmem:[%s17 + $0x8] sm:$0xff]
    %v711 = vld [vmem:[%s17 + $0x10] sm:$0xff]
    %v712 = vld [vmem:[%s17 + $0x18] sm:$0xff]
    %v713 = vld [vmem:[%s17 + $0x20] sm:$0xff]
    %v714 = vld [vmem:[%s17 + $0x28] sm:$0xff]
    %v715 = vld [vmem:[%s17 + $0x30] sm:$0xff]
    %v716 = vld [vmem:[%s17 + $0x38] sm:$0xff]
    %v717 = vld [vmem:[%s18] sm:$0x1]
    %v719 = vperm.slane %v717, 0
    %vm721 = vcmask 523264
    %v723 = vsel %vm721, %v707, 0
    %v726 = vsel %vm721, %v708, 0
    %728 = vmatpush.msra.mxu0 0.0
    %729 = vmatpush.msra.mxu0 0.0
    %730 = vmatpush.msra.mxu0 0.0
    %731 = vmatpush.msra.mxu0 0.0
    %732 = vmatpush.msra.mxu0 0.0
    %733 = vmatpush.msra.mxu0 0.0
    %734 = vmatpush.msra.mxu0 0.0
    %735 = vmatpush.msra.mxu0 0.0
    %736 = vmatpush.msra.mxu0 %v716
    %737 = vmatpush.msra.mxu0 %v715
    %738 = vmatpush.msra.mxu0 %v714
    %739 = vmatpush.msra.mxu0 %v713
    %740 = vmatpush.msra.mxu0 %v712
    %741 = vmatpush.msra.mxu0 %v711
    %742 = vmatpush.msra.mxu0 %v710
    %743 = vmatpush.msra.mxu0 %v709
    %744 = vmatmul.f32.gmra.mxu0 %v723
    %v745 = vpop.f32.mrf.mxu0
    %v746 = vadd.f32 %v719, %v745
    %747 = vmatmul.f32.gmra.mxu0 %v726
    %v748 = vpop.f32.mrf.mxu0
    %v749 = vadd.f32 %v719, %v748
    %750 = vdwg.mxu0
    %v751 = vadd.f32 %v746, %v652
    %v752 = vadd.f32 %v749, %v653
    %v753 = vld [vmem:[%s19] sm:$0x1]
    %v754 = vld [vmem:[%s20] sm:$0x1]
    %v755 = vsel %vm88, %v751, 0.0
    %756 = vadd.xlane.f32.xlu0 %v755
    %v757 = vpop.xlane.xlu0 %756
    %v758 = vsel %vm88, %v752, 0.0
    %759 = vadd.xlane.f32.xlu0 %v758
    %v760 = vpop.xlane.xlu0 %759
    %v761 = vmul.f32 %v757, %v101
    %v762 = vmul.f32 %v760, %v101
    %v763 = vsub.f32 %v751, %v761
    %v764 = vsub.f32 %v752, %v762
    %v765 = vmul.f32 %v763, %v763
    %v766 = vmul.f32 %v764, %v764
    %v767 = vsel %vm88, %v765, 0.0
    %768 = vadd.xlane.f32.xlu0 %v767
    %v769 = vpop.xlane.xlu0 %768
    %v770 = vsel %vm88, %v766, 0.0
    %771 = vadd.xlane.f32.xlu0 %v770
    %v772 = vpop.xlane.xlu0 %771
    %v773 = vmul.f32 %v769, %v101
    %v774 = vmul.f32 %v772, %v101
    %v775 = vadd.f32 %v773, 1e-05
    %v776 = vadd.f32 %v774, 1e-05
    %v777 = vrsqrt.pop %v775
    %v778 = vmul.f32 %v777, %v775
    %v779 = vmul.f32 %v778, %v777
    %v780 = vmul.f32 0.5, %v779
    %v781 = vsub.f32 1.5, %v780
    %v782 = vmul.f32 %v777, %v781
    %vm783 = vweird.f32 %v775
    %vm784 = vweird.f32 %v777
    %vm785 = vmor %vm783, %vm784
    %v786 = vsel %vm785, %v777, %v782
    %v787 = vrsqrt.pop %v776
    %v788 = vmul.f32 %v787, %v776
    %v789 = vmul.f32 %v788, %v787
    %v790 = vmul.f32 0.5, %v789
    %v791 = vsub.f32 1.5, %v790
    %v792 = vmul.f32 %v787, %v791
    %vm793 = vweird.f32 %v776
    %vm794 = vweird.f32 %v787
    %vm795 = vmor %vm793, %vm794
    %v796 = vsel %vm795, %v787, %v792
    %v797 = vmul.f32 %v763, %v786
    %v798 = vmul.f32 %v764, %v796
    %v800 = vperm.slane %v753, 0
    %v802 = vmul.f32 %v797, %v800
    %v803 = vmul.f32 %v798, %v800
    %v805 = vperm.slane %v754, 0
    %v807 = vadd.f32 %v802, %v805
    %v808 = vadd.f32 %v803, %v805
    %s809 = scalar_lea.vmem %s5, 64
    %v810 = vld [vmem:[%s809] sm:$0xff]
    %v811 = vld [vmem:[%s809 + $0x8] sm:$0xff]
    %v812 = vld [vmem:[%s809 + $0x10] sm:$0xff]
    %v813 = vld [vmem:[%s809 + $0x18] sm:$0xff]
    %s814 = scalar_lea.vmem %s6, 2
    %v815 = vld [vmem:[%s814] sm:$0x1]
    %v817 = vperm.slane %v815, 0
    %v820 = vsel %vm88, %v807, 0
    %v823 = vsel %vm88, %v808, 0
    %825 = vmatpush.msra.mxu0 0.0
    %826 = vmatpush.msra.mxu0 0.0
    %827 = vmatpush.msra.mxu0 0.0
    %828 = vmatpush.msra.mxu0 0.0
    %829 = vmatpush.msra.mxu0 0.0
    %830 = vmatpush.msra.mxu0 0.0
    %831 = vmatpush.msra.mxu0 0.0
    %832 = vmatpush.msra.mxu0 0.0
    %833 = vmatpush.msra.mxu0 0.0
    %834 = vmatpush.msra.mxu0 0.0
    %835 = vmatpush.msra.mxu0 0.0
    %836 = vmatpush.msra.mxu0 0.0
    %837 = vmatpush.msra.mxu0 %v813
    %838 = vmatpush.msra.mxu0 %v812
    %839 = vmatpush.msra.mxu0 %v811
    %840 = vmatpush.msra.mxu0 %v810
    %841 = vmatmul.f32.gmra.mxu0 %v820
    %v842 = vpop.f32.mrf.mxu0
    %v843 = vadd.f32 %v817, %v842
    %844 = vmatmul.f32.gmra.mxu0 %v823
    %v845 = vpop.f32.mrf.mxu0
    %v846 = vadd.f32 %v817, %v845
    %847 = vdwg.mxu0
    %v848 = vmul.f32 %v843, 0.25
    %v849 = vmul.f32 %v846, 0.25
    %s850 = scalar_lea.vmem %s7, 64
    %v851 = vld [vmem:[%s850] sm:$0xff]
    %v852 = vld [vmem:[%s850 + $0x8] sm:$0xff]
    %v853 = vld [vmem:[%s850 + $0x10] sm:$0xff]
    %v854 = vld [vmem:[%s850 + $0x18] sm:$0xff]
    %s855 = scalar_lea.vmem %s8, 2
    %v856 = vld [vmem:[%s855] sm:$0x1]
    %v858 = vperm.slane %v856, 0
    %860 = vmatpush.msra.mxu0 0.0
    %861 = vmatpush.msra.mxu0 0.0
    %862 = vmatpush.msra.mxu0 0.0
    %863 = vmatpush.msra.mxu0 0.0
    %864 = vmatpush.msra.mxu0 0.0
    %865 = vmatpush.msra.mxu0 0.0
    %866 = vmatpush.msra.mxu0 0.0
    %867 = vmatpush.msra.mxu0 0.0
    %868 = vmatpush.msra.mxu0 0.0
    %869 = vmatpush.msra.mxu0 0.0
    %870 = vmatpush.msra.mxu0 0.0
    %871 = vmatpush.msra.mxu0 0.0
    %872 = vmatpush.msra.mxu0 %v854
    %873 = vmatpush.msra.mxu0 %v853
    %874 = vmatpush.msra.mxu0 %v852
    %875 = vmatpush.msra.mxu0 %v851
    %876 = vmatmul.f32.gmra.mxu0 %v820
    %v877 = vpop.f32.mrf.mxu0
    %v878 = vadd.f32 %v858, %v877
    %879 = vmatmul.f32.gmra.mxu0 %v823
    %v880 = vpop.f32.mrf.mxu0
    %v881 = vadd.f32 %v858, %v880
    %882 = vdwg.mxu0
    %s883 = scalar_lea.vmem %s9, 64
    %v884 = vld [vmem:[%s883] sm:$0xff]
    %v885 = vld [vmem:[%s883 + $0x8] sm:$0xff]
    %v886 = vld [vmem:[%s883 + $0x10] sm:$0xff]
    %v887 = vld [vmem:[%s883 + $0x18] sm:$0xff]
    %s888 = scalar_lea.vmem %s10, 2
    %v889 = vld [vmem:[%s888] sm:$0x1]
    %v891 = vperm.slane %v889, 0
    %893 = vmatpush.msra.mxu0 0.0
    %894 = vmatpush.msra.mxu0 0.0
    %895 = vmatpush.msra.mxu0 0.0
    %896 = vmatpush.msra.mxu0 0.0
    %897 = vmatpush.msra.mxu0 0.0
    %898 = vmatpush.msra.mxu0 0.0
    %899 = vmatpush.msra.mxu0 0.0
    %900 = vmatpush.msra.mxu0 0.0
    %901 = vmatpush.msra.mxu0 0.0
    %902 = vmatpush.msra.mxu0 0.0
    %903 = vmatpush.msra.mxu0 0.0
    %904 = vmatpush.msra.mxu0 0.0
    %905 = vmatpush.msra.mxu0 %v887
    %906 = vmatpush.msra.mxu0 %v886
    %907 = vmatpush.msra.mxu0 %v885
    %908 = vmatpush.msra.mxu0 %v884
    %909 = vmatmul.f32.gmra.mxu0 %v820
    %v910 = vpop.f32.mrf.mxu0
    %v911 = vadd.f32 %v891, %v910
    %912 = vmatmul.f32.gmra.mxu0 %v823
    %v913 = vpop.f32.mrf.mxu0
    %v914 = vadd.f32 %v891, %v913
    %915 = vdwg.mxu0
    %v917 = vsel %vm253, %v848, 0
    %v920 = vsel %vm253, %v849, 0
    %v923 = vsel %vm253, %v878, 0
    %v926 = vsel %vm253, %v881, 0
    %928 = vmatpush.xpose.msra.mxu0 0.0
    %929 = vmatpush.xpose.msra.mxu0 0.0
    %930 = vmatpush.xpose.msra.mxu0 0.0
    %931 = vmatpush.xpose.msra.mxu0 0.0
    %932 = vmatpush.xpose.msra.mxu0 0.0
    %933 = vmatpush.xpose.msra.mxu0 0.0
    %934 = vmatpush.xpose.msra.mxu0 0.0
    %935 = vmatpush.xpose.msra.mxu0 0.0
    %936 = vmatpush.xpose.msra.mxu0 0.0
    %937 = vmatpush.xpose.msra.mxu0 0.0
    %938 = vmatpush.xpose.msra.mxu0 0.0
    %939 = vmatpush.xpose.msra.mxu0 0.0
    %940 = vmatpush.xpose.msra.mxu0 0.0
    %941 = vmatpush.xpose.msra.mxu0 0.0
    %942 = vmatpush.xpose.msra.mxu0 %v926
    %943 = vmatpush.xpose.msra.mxu0 %v923
    %944 = vmatmul.f32.gmra.mxu0 %v917
    %v945 = vpop.f32.mrf.mxu0
    %v946 = vadd.f32 %v150, %v945
    %947 = vmatmul.f32.gmra.mxu0 %v920
    %v948 = vpop.f32.mrf.mxu0
    %v949 = vadd.f32 %v151, %v948
    %950 = vdwg.mxu0
    %v951 = vsel %vm253, %v946, -inf
    %952 = vmax.xlane.f32.xlu0 %v951
    %v953 = vpop.xlane.xlu0 %952
    %v954 = vsel %vm253, %v949, -inf
    %955 = vmax.xlane.f32.xlu0 %v954
    %v956 = vpop.xlane.xlu0 %955
    %v957 = vsub.f32 %v946, %v953
    %v958 = vsub.f32 %v949, %v956
    %v959 = vmul.f32 %v957, 1.442695
    %v960 = vpow.pop %v959
    %v961 = vmul.f32 %v958, 1.442695
    %v962 = vpow.pop %v961
    %v963 = vsel %vm253, %v960, 0.0
    %964 = vadd.xlane.f32.xlu0 %v963
    %v965 = vpop.xlane.xlu0 %964
    %v966 = vsel %vm253, %v962, 0.0
    %967 = vadd.xlane.f32.xlu0 %v966
    %v968 = vpop.xlane.xlu0 %967
    %v969 = vrcp.pop %v965
    %v970 = vrcp.pop %v968
    %v971 = vmul.f32 %v960, %v969
    %v972 = vmul.f32 %v962, %v970
    %v974 = vsel %vm253, %v971, 0
    %v977 = vsel %vm253, %v972, 0
    %979 = vmatpush.msra.mxu0 0.0
    %980 = vmatpush.msra.mxu0 0.0
    %981 = vmatpush.msra.mxu0 0.0
    %982 = vmatpush.msra.mxu0 0.0
    %983 = vmatpush.msra.mxu0 0.0
    %984 = vmatpush.msra.mxu0 0.0
    %985 = vmatpush.msra.mxu0 0.0
    %986 = vmatpush.msra.mxu0 0.0
    %987 = vmatpush.msra.mxu0 0.0
    %988 = vmatpush.msra.mxu0 0.0
    %989 = vmatpush.msra.mxu0 0.0
    %990 = vmatpush.msra.mxu0 0.0
    %991 = vmatpush.msra.mxu0 0.0
    %992 = vmatpush.msra.mxu0 0.0
    %993 = vmatpush.msra.mxu0 %v914
    %994 = vmatpush.msra.mxu0 %v911
    %995 = vmatmul.f32.gmra.mxu0 %v974
    %v996 = vpop.f32.mrf.mxu0
    %v997 = vadd.f32 0.0, %v996
    %998 = vmatmul.f32.gmra.mxu0 %v977
    %v999 = vpop.f32.mrf.mxu0
    %v1000 = vadd.f32 0.0, %v999
    %1001 = vdwg.mxu0
    %s1002 = scalar_lea.vmem %s11, 32
    %v1003 = vld [vmem:[%s1002] sm:$0xff]
    %v1004 = vld [vmem:[%s1002 + $0x8] sm:$0xff]
    %s1005 = scalar_lea.vmem %s5, 96
    %v1006 = vld [vmem:[%s1005] sm:$0xff]
    %v1007 = vld [vmem:[%s1005 + $0x8] sm:$0xff]
    %v1008 = vld [vmem:[%s1005 + $0x10] sm:$0xff]
    %v1009 = vld [vmem:[%s1005 + $0x18] sm:$0xff]
    %s1010 = scalar_lea.vmem %s6, 3
    %v1011 = vld [vmem:[%s1010] sm:$0x1]
    %v1013 = vperm.slane %v1011, 0
    %1015 = vmatpush.msra.mxu0 0.0
    %1016 = vmatpush.msra.mxu0 0.0
    %1017 = vmatpush.msra.mxu0 0.0
    %1018 = vmatpush.msra.mxu0 0.0
    %1019 = vmatpush.msra.mxu0 0.0
    %1020 = vmatpush.msra.mxu0 0.0
    %1021 = vmatpush.msra.mxu0 0.0
    %1022 = vmatpush.msra.mxu0 0.0
    %1023 = vmatpush.msra.mxu0 0.0
    %1024 = vmatpush.msra.mxu0 0.0
    %1025 = vmatpush.msra.mxu0 0.0
    %1026 = vmatpush.msra.mxu0 0.0
    %1027 = vmatpush.msra.mxu0 %v1009
    %1028 = vmatpush.msra.mxu0 %v1008
    %1029 = vmatpush.msra.mxu0 %v1007
    %1030 = vmatpush.msra.mxu0 %v1006
    %1031 = vmatmul.f32.gmra.mxu0 %v820
    %v1032 = vpop.f32.mrf.mxu0
    %v1033 = vadd.f32 %v1013, %v1032
    %1034 = vmatmul.f32.gmra.mxu0 %v823
    %v1035 = vpop.f32.mrf.mxu0
    %v1036 = vadd.f32 %v1013, %v1035
    %1037 = vdwg.mxu0
    %v1038 = vmul.f32 %v1033, 0.25
    %v1039 = vmul.f32 %v1036, 0.25
    %s1040 = scalar_lea.vmem %s7, 96
    %v1041 = vld [vmem:[%s1040] sm:$0xff]
    %v1042 = vld [vmem:[%s1040 + $0x8] sm:$0xff]
    %v1043 = vld [vmem:[%s1040 + $0x10] sm:$0xff]
    %v1044 = vld [vmem:[%s1040 + $0x18] sm:$0xff]
    %s1045 = scalar_lea.vmem %s8, 3
    %v1046 = vld [vmem:[%s1045] sm:$0x1]
    %v1048 = vperm.slane %v1046, 0
    %1050 = vmatpush.msra.mxu0 0.0
    %1051 = vmatpush.msra.mxu0 0.0
    %1052 = vmatpush.msra.mxu0 0.0
    %1053 = vmatpush.msra.mxu0 0.0
    %1054 = vmatpush.msra.mxu0 0.0
    %1055 = vmatpush.msra.mxu0 0.0
    %1056 = vmatpush.msra.mxu0 0.0
    %1057 = vmatpush.msra.mxu0 0.0
    %1058 = vmatpush.msra.mxu0 0.0
    %1059 = vmatpush.msra.mxu0 0.0
    %1060 = vmatpush.msra.mxu0 0.0
    %1061 = vmatpush.msra.mxu0 0.0
    %1062 = vmatpush.msra.mxu0 %v1044
    %1063 = vmatpush.msra.mxu0 %v1043
    %1064 = vmatpush.msra.mxu0 %v1042
    %1065 = vmatpush.msra.mxu0 %v1041
    %1066 = vmatmul.f32.gmra.mxu0 %v820
    %v1067 = vpop.f32.mrf.mxu0
    %v1068 = vadd.f32 %v1048, %v1067
    %1069 = vmatmul.f32.gmra.mxu0 %v823
    %v1070 = vpop.f32.mrf.mxu0
    %v1071 = vadd.f32 %v1048, %v1070
    %1072 = vdwg.mxu0
    %s1073 = scalar_lea.vmem %s9, 96
    %v1074 = vld [vmem:[%s1073] sm:$0xff]
    %v1075 = vld [vmem:[%s1073 + $0x8] sm:$0xff]
    %v1076 = vld [vmem:[%s1073 + $0x10] sm:$0xff]
    %v1077 = vld [vmem:[%s1073 + $0x18] sm:$0xff]
    %s1078 = scalar_lea.vmem %s10, 3
    %v1079 = vld [vmem:[%s1078] sm:$0x1]
    %v1081 = vperm.slane %v1079, 0
    %1083 = vmatpush.msra.mxu0 0.0
    %1084 = vmatpush.msra.mxu0 0.0
    %1085 = vmatpush.msra.mxu0 0.0
    %1086 = vmatpush.msra.mxu0 0.0
    %1087 = vmatpush.msra.mxu0 0.0
    %1088 = vmatpush.msra.mxu0 0.0
    %1089 = vmatpush.msra.mxu0 0.0
    %1090 = vmatpush.msra.mxu0 0.0
    %1091 = vmatpush.msra.mxu0 0.0
    %1092 = vmatpush.msra.mxu0 0.0
    %1093 = vmatpush.msra.mxu0 0.0
    %1094 = vmatpush.msra.mxu0 0.0
    %1095 = vmatpush.msra.mxu0 %v1077
    %1096 = vmatpush.msra.mxu0 %v1076
    %1097 = vmatpush.msra.mxu0 %v1075
    %1098 = vmatpush.msra.mxu0 %v1074
    %1099 = vmatmul.f32.gmra.mxu0 %v820
    %v1100 = vpop.f32.mrf.mxu0
    %v1101 = vadd.f32 %v1081, %v1100
    %1102 = vmatmul.f32.gmra.mxu0 %v823
    %v1103 = vpop.f32.mrf.mxu0
    %v1104 = vadd.f32 %v1081, %v1103
    %1105 = vdwg.mxu0
    %v1107 = vsel %vm253, %v1038, 0
    %v1110 = vsel %vm253, %v1039, 0
    %v1113 = vsel %vm253, %v1068, 0
    %v1116 = vsel %vm253, %v1071, 0
    %1118 = vmatpush.xpose.msra.mxu0 0.0
    %1119 = vmatpush.xpose.msra.mxu0 0.0
    %1120 = vmatpush.xpose.msra.mxu0 0.0
    %1121 = vmatpush.xpose.msra.mxu0 0.0
    %1122 = vmatpush.xpose.msra.mxu0 0.0
    %1123 = vmatpush.xpose.msra.mxu0 0.0
    %1124 = vmatpush.xpose.msra.mxu0 0.0
    %1125 = vmatpush.xpose.msra.mxu0 0.0
    %1126 = vmatpush.xpose.msra.mxu0 0.0
    %1127 = vmatpush.xpose.msra.mxu0 0.0
    %1128 = vmatpush.xpose.msra.mxu0 0.0
    %1129 = vmatpush.xpose.msra.mxu0 0.0
    %1130 = vmatpush.xpose.msra.mxu0 0.0
    %1131 = vmatpush.xpose.msra.mxu0 0.0
    %1132 = vmatpush.xpose.msra.mxu0 %v1116
    %1133 = vmatpush.xpose.msra.mxu0 %v1113
    %1134 = vmatmul.f32.gmra.mxu0 %v1107
    %v1135 = vpop.f32.mrf.mxu0
    %v1136 = vadd.f32 %v150, %v1135
    %1137 = vmatmul.f32.gmra.mxu0 %v1110
    %v1138 = vpop.f32.mrf.mxu0
    %v1139 = vadd.f32 %v151, %v1138
    %1140 = vdwg.mxu0
    %v1141 = vsel %vm253, %v1136, -inf
    %1142 = vmax.xlane.f32.xlu0 %v1141
    %v1143 = vpop.xlane.xlu0 %1142
    %v1144 = vsel %vm253, %v1139, -inf
    %1145 = vmax.xlane.f32.xlu0 %v1144
    %v1146 = vpop.xlane.xlu0 %1145
    %v1147 = vsub.f32 %v1136, %v1143
    %v1148 = vsub.f32 %v1139, %v1146
    %v1149 = vmul.f32 %v1147, 1.442695
    %v1150 = vpow.pop %v1149
    %v1151 = vmul.f32 %v1148, 1.442695
    %v1152 = vpow.pop %v1151
    %v1153 = vsel %vm253, %v1150, 0.0
    %1154 = vadd.xlane.f32.xlu0 %v1153
    %v1155 = vpop.xlane.xlu0 %1154
    %v1156 = vsel %vm253, %v1152, 0.0
    %1157 = vadd.xlane.f32.xlu0 %v1156
    %v1158 = vpop.xlane.xlu0 %1157
    %v1159 = vrcp.pop %v1155
    %v1160 = vrcp.pop %v1158
    %v1161 = vmul.f32 %v1150, %v1159
    %v1162 = vmul.f32 %v1152, %v1160
    %v1164 = vsel %vm253, %v1161, 0
    %v1167 = vsel %vm253, %v1162, 0
    %1169 = vmatpush.msra.mxu0 0.0
    %1170 = vmatpush.msra.mxu0 0.0
    %1171 = vmatpush.msra.mxu0 0.0
    %1172 = vmatpush.msra.mxu0 0.0
    %1173 = vmatpush.msra.mxu0 0.0
    %1174 = vmatpush.msra.mxu0 0.0
    %1175 = vmatpush.msra.mxu0 0.0
    %1176 = vmatpush.msra.mxu0 0.0
    %1177 = vmatpush.msra.mxu0 0.0
    %1178 = vmatpush.msra.mxu0 0.0
    %1179 = vmatpush.msra.mxu0 0.0
    %1180 = vmatpush.msra.mxu0 0.0
    %1181 = vmatpush.msra.mxu0 0.0
    %1182 = vmatpush.msra.mxu0 0.0
    %1183 = vmatpush.msra.mxu0 %v1104
    %1184 = vmatpush.msra.mxu0 %v1101
    %1185 = vmatmul.f32.gmra.mxu0 %v1164
    %v1186 = vpop.f32.mrf.mxu0
    %v1187 = vadd.f32 0.0, %v1186
    %1188 = vmatmul.f32.gmra.mxu0 %v1167
    %v1189 = vpop.f32.mrf.mxu0
    %v1190 = vadd.f32 0.0, %v1189
    %1191 = vdwg.mxu0
    %s1192 = scalar_lea.vmem %s11, 48
    %v1193 = vld [vmem:[%s1192] sm:$0xff]
    %v1194 = vld [vmem:[%s1192 + $0x8] sm:$0xff]
    %v1196 = vsel %vm253, %v1187, 0
    %v1199 = vsel %vm253, %v1190, 0
    %1201 = vmatpush.msra.mxu0 0.0
    %1202 = vmatpush.msra.mxu0 0.0
    %1203 = vmatpush.msra.mxu0 0.0
    %1204 = vmatpush.msra.mxu0 0.0
    %1205 = vmatpush.msra.mxu0 0.0
    %1206 = vmatpush.msra.mxu0 0.0
    %1207 = vmatpush.msra.mxu0 0.0
    %1208 = vmatpush.msra.mxu0 0.0
    %1209 = vmatpush.msra.mxu0 0.0
    %1210 = vmatpush.msra.mxu0 0.0
    %1211 = vmatpush.msra.mxu0 0.0
    %1212 = vmatpush.msra.mxu0 0.0
    %1213 = vmatpush.msra.mxu0 0.0
    %1214 = vmatpush.msra.mxu0 0.0
    %1215 = vmatpush.msra.mxu0 %v1194
    %1216 = vmatpush.msra.mxu0 %v1193
    %1217 = vmatmul.f32.gmra.mxu0 %v1196
    %v1218 = vpop.f32.mrf.mxu0
    %v1219 = vadd.f32 0.0, %v1218
    %1220 = vmatmul.f32.gmra.mxu0 %v1199
    %v1221 = vpop.f32.mrf.mxu0
    %v1222 = vadd.f32 0.0, %v1221
    %1223 = vdwg.mxu0
    %v1225 = vsel %vm253, %v997, 0
    %v1228 = vsel %vm253, %v1000, 0
    %1230 = vmatpush.msra.mxu0 0.0
    %1231 = vmatpush.msra.mxu0 0.0
    %1232 = vmatpush.msra.mxu0 0.0
    %1233 = vmatpush.msra.mxu0 0.0
    %1234 = vmatpush.msra.mxu0 0.0
    %1235 = vmatpush.msra.mxu0 0.0
    %1236 = vmatpush.msra.mxu0 0.0
    %1237 = vmatpush.msra.mxu0 0.0
    %1238 = vmatpush.msra.mxu0 0.0
    %1239 = vmatpush.msra.mxu0 0.0
    %1240 = vmatpush.msra.mxu0 0.0
    %1241 = vmatpush.msra.mxu0 0.0
    %1242 = vmatpush.msra.mxu0 0.0
    %1243 = vmatpush.msra.mxu0 0.0
    %1244 = vmatpush.msra.mxu0 %v1004
    %1245 = vmatpush.msra.mxu0 %v1003
    %1246 = vmatmul.f32.gmra.mxu0 %v1225
    %v1247 = vpop.f32.mrf.mxu0
    %v1248 = vadd.f32 %v1219, %v1247
    %1249 = vmatmul.f32.gmra.mxu0 %v1228
    %v1250 = vpop.f32.mrf.mxu0
    %v1251 = vadd.f32 %v1222, %v1250
    %1252 = vdwg.mxu0
    %s1253 = scalar_lea.vmem %s12, 1
    %v1254 = vld [vmem:[%s1253] sm:$0x1]
    %v1256 = vperm.slane %v1254, 0
    %v1258 = vadd.f32 %v1248, %v1256
    %v1259 = vadd.f32 %v1251, %v1256
    %v1260 = vadd.f32 %v1258, %v807
    %v1261 = vadd.f32 %v1259, %v808
    %s1262 = scalar_lea.vmem %s13, 1
    %v1263 = vld [vmem:[%s1262] sm:$0x1]
    %s1264 = scalar_lea.vmem %s14, 1
    %v1265 = vld [vmem:[%s1264] sm:$0x1]
    %v1266 = vsel %vm88, %v1260, 0.0
    %1267 = vadd.xlane.f32.xlu0 %v1266
    %v1268 = vpop.xlane.xlu0 %1267
    %v1269 = vsel %vm88, %v1261, 0.0
    %1270 = vadd.xlane.f32.xlu0 %v1269
    %v1271 = vpop.xlane.xlu0 %1270
    %v1272 = vmul.f32 %v1268, %v101
    %v1273 = vmul.f32 %v1271, %v101
    %v1274 = vsub.f32 %v1260, %v1272
    %v1275 = vsub.f32 %v1261, %v1273
    %v1276 = vmul.f32 %v1274, %v1274
    %v1277 = vmul.f32 %v1275, %v1275
    %v1278 = vsel %vm88, %v1276, 0.0
    %1279 = vadd.xlane.f32.xlu0 %v1278
    %v1280 = vpop.xlane.xlu0 %1279
    %v1281 = vsel %vm88, %v1277, 0.0
    %1282 = vadd.xlane.f32.xlu0 %v1281
    %v1283 = vpop.xlane.xlu0 %1282
    %v1284 = vmul.f32 %v1280, %v101
    %v1285 = vmul.f32 %v1283, %v101
    %v1286 = vadd.f32 %v1284, 1e-05
    %v1287 = vadd.f32 %v1285, 1e-05
    %v1288 = vrsqrt.pop %v1286
    %v1289 = vmul.f32 %v1288, %v1286
    %v1290 = vmul.f32 %v1289, %v1288
    %v1291 = vmul.f32 0.5, %v1290
    %v1292 = vsub.f32 1.5, %v1291
    %v1293 = vmul.f32 %v1288, %v1292
    %vm1294 = vweird.f32 %v1286
    %vm1295 = vweird.f32 %v1288
    %vm1296 = vmor %vm1294, %vm1295
    %v1297 = vsel %vm1296, %v1288, %v1293
    %v1298 = vrsqrt.pop %v1287
    %v1299 = vmul.f32 %v1298, %v1287
    %v1300 = vmul.f32 %v1299, %v1298
    %v1301 = vmul.f32 0.5, %v1300
    %v1302 = vsub.f32 1.5, %v1301
    %v1303 = vmul.f32 %v1298, %v1302
    %vm1304 = vweird.f32 %v1287
    %vm1305 = vweird.f32 %v1298
    %vm1306 = vmor %vm1304, %vm1305
    %v1307 = vsel %vm1306, %v1298, %v1303
    %v1308 = vmul.f32 %v1274, %v1297
    %v1309 = vmul.f32 %v1275, %v1307
    %v1311 = vperm.slane %v1263, 0
    %v1313 = vmul.f32 %v1308, %v1311
    %v1314 = vmul.f32 %v1309, %v1311
    %v1316 = vperm.slane %v1265, 0
    %v1318 = vadd.f32 %v1313, %v1316
    %v1319 = vadd.f32 %v1314, %v1316
    %s1320 = scalar_lea.vmem %s15, 32
    %v1321 = vld [vmem:[%s1320] sm:$0xff]
    %v1322 = vld [vmem:[%s1320 + $0x8] sm:$0xff]
    %v1323 = vld [vmem:[%s1320 + $0x10] sm:$0xff]
    %v1324 = vld [vmem:[%s1320 + $0x18] sm:$0xff]
    %s1325 = scalar_lea.vmem %s16, 1
    %v1326 = vld [vmem:[%s1325] sm:$0x1]
    %v1328 = vperm.slane %v1326, 0
    %v1331 = vsel %vm88, %v1318, 0
    %v1334 = vsel %vm88, %v1319, 0
    %1336 = vmatpush.msra.mxu0 0.0
    %1337 = vmatpush.msra.mxu0 0.0
    %1338 = vmatpush.msra.mxu0 0.0
    %1339 = vmatpush.msra.mxu0 0.0
    %1340 = vmatpush.msra.mxu0 0.0
    %1341 = vmatpush.msra.mxu0 0.0
    %1342 = vmatpush.msra.mxu0 0.0
    %1343 = vmatpush.msra.mxu0 0.0
    %1344 = vmatpush.msra.mxu0 0.0
    %1345 = vmatpush.msra.mxu0 0.0
    %1346 = vmatpush.msra.mxu0 0.0
    %1347 = vmatpush.msra.mxu0 0.0
    %1348 = vmatpush.msra.mxu0 %v1324
    %1349 = vmatpush.msra.mxu0 %v1323
    %1350 = vmatpush.msra.mxu0 %v1322
    %1351 = vmatpush.msra.mxu0 %v1321
    %1352 = vmatmul.f32.gmra.mxu0 %v1331
    %v1353 = vpop.f32.mrf.mxu0
    %v1354 = vadd.f32 %v1328, %v1353
    %1355 = vmatmul.f32.gmra.mxu0 %v1334
    %v1356 = vpop.f32.mrf.mxu0
    %v1357 = vadd.f32 %v1328, %v1356
    %1358 = vdwg.mxu0
    %v1359 = vmul.f32 %v1354, 0.5
    %v1360 = vmul.f32 %v1357, 0.5
    %v1361 = vmul.f32 %v1354, 0.044715
    %v1362 = vmul.f32 %v1357, 0.044715
    %v1363 = vmul.f32 %v1361, %v1354
    %v1364 = vmul.f32 %v1362, %v1357
    %v1365 = vmul.f32 %v1363, %v1354
    %v1366 = vmul.f32 %v1364, %v1357
    %v1367 = vadd.f32 %v1354, %v1365
    %v1368 = vadd.f32 %v1357, %v1366
    %v1369 = vmul.f32 %v1367, 0.7978846
    %v1370 = vmul.f32 %v1368, 0.7978846
    %v1371 = vtanh.pop %v1369
    %v1372 = vtanh.pop %v1370
    %v1373 = vadd.f32 %v1371, 1.0
    %v1374 = vadd.f32 %v1372, 1.0
    %v1375 = vmul.f32 %v1359, %v1373
    %v1376 = vmul.f32 %v1360, %v1374
    %s1377 = scalar_lea.vmem %s17, 64
    %v1378 = vld [vmem:[%s1377] sm:$0xff]
    %v1379 = vld [vmem:[%s1377 + $0x8] sm:$0xff]
    %v1380 = vld [vmem:[%s1377 + $0x10] sm:$0xff]
    %v1381 = vld [vmem:[%s1377 + $0x18] sm:$0xff]
    %v1382 = vld [vmem:[%s1377 + $0x20] sm:$0xff]
    %v1383 = vld [vmem:[%s1377 + $0x28] sm:$0xff]
    %v1384 = vld [vmem:[%s1377 + $0x30] sm:$0xff]
    %v1385 = vld [vmem:[%s1377 + $0x38] sm:$0xff]
    %s1386 = scalar_lea.vmem %s18, 1
    %v1387 = vld [vmem:[%s1386] sm:$0x1]
    %v1389 = vperm.slane %v1387, 0
    %v1392 = vsel %vm721, %v1375, 0
    %v1395 = vsel %vm721, %v1376, 0
    %1397 = vmatpush.msra.mxu0 0.0
    %1398 = vmatpush.msra.mxu0 0.0
    %1399 = vmatpush.msra.mxu0 0.0
    %1400 = vmatpush.msra.mxu0 0.0
    %1401 = vmatpush.msra.mxu0 0.0
    %1402 = vmatpush.msra.mxu0 0.0
    %1403 = vmatpush.msra.mxu0 0.0
    %1404 = vmatpush.msra.mxu0 0.0
    %1405 = vmatpush.msra.mxu0 %v1385
    %1406 = vmatpush.msra.mxu0 %v1384
    %1407 = vmatpush.msra.mxu0 %v1383
    %1408 = vmatpush.msra.mxu0 %v1382
    %1409 = vmatpush.msra.mxu0 %v1381
    %1410 = vmatpush.msra.mxu0 %v1380
    %1411 = vmatpush.msra.mxu0 %v1379
    %1412 = vmatpush.msra.mxu0 %v1378
    %1413 = vmatmul.f32.gmra.mxu0 %v1392
    %v1414 = vpop.f32.mrf.mxu0
    %v1415 = vadd.f32 %v1389, %v1414
    %1416 = vmatmul.f32.gmra.mxu0 %v1395
    %v1417 = vpop.f32.mrf.mxu0
    %v1418 = vadd.f32 %v1389, %v1417
    %1419 = vdwg.mxu0
    %v1420 = vadd.f32 %v1415, %v1318
    %v1421 = vadd.f32 %v1418, %v1319
    %s1422 = scalar_lea.vmem %s19, 1
    %v1423 = vld [vmem:[%s1422] sm:$0x1]
    %s1424 = scalar_lea.vmem %s20, 1
    %v1425 = vld [vmem:[%s1424] sm:$0x1]
    %v1426 = vsel %vm88, %v1420, 0.0
    %1427 = vadd.xlane.f32.xlu0 %v1426
    %v1428 = vpop.xlane.xlu0 %1427
    %v1429 = vsel %vm88, %v1421, 0.0
    %1430 = vadd.xlane.f32.xlu0 %v1429
    %v1431 = vpop.xlane.xlu0 %1430
    %v1432 = vmul.f32 %v1428, %v101
    %v1433 = vmul.f32 %v1431, %v101
    %v1434 = vsub.f32 %v1420, %v1432
    %v1435 = vsub.f32 %v1421, %v1433
    %v1436 = vmul.f32 %v1434, %v1434
    %v1437 = vmul.f32 %v1435, %v1435
    %v1438 = vsel %vm88, %v1436, 0.0
    %1439 = vadd.xlane.f32.xlu0 %v1438
    %v1440 = vpop.xlane.xlu0 %1439
    %v1441 = vsel %vm88, %v1437, 0.0
    %1442 = vadd.xlane.f32.xlu0 %v1441
    %v1443 = vpop.xlane.xlu0 %1442
    %v1444 = vmul.f32 %v1440, %v101
    %v1445 = vmul.f32 %v1443, %v101
    %v1446 = vadd.f32 %v1444, 1e-05
    %v1447 = vadd.f32 %v1445, 1e-05
    %v1448 = vrsqrt.pop %v1446
    %v1449 = vmul.f32 %v1448, %v1446
    %v1450 = vmul.f32 %v1449, %v1448
    %v1451 = vmul.f32 0.5, %v1450
    %v1452 = vsub.f32 1.5, %v1451
    %v1453 = vmul.f32 %v1448, %v1452
    %vm1454 = vweird.f32 %v1446
    %vm1455 = vweird.f32 %v1448
    %vm1456 = vmor %vm1454, %vm1455
    %v1457 = vsel %vm1456, %v1448, %v1453
    %v1458 = vrsqrt.pop %v1447
    %v1459 = vmul.f32 %v1458, %v1447
    %v1460 = vmul.f32 %v1459, %v1458
    %v1461 = vmul.f32 0.5, %v1460
    %v1462 = vsub.f32 1.5, %v1461
    %v1463 = vmul.f32 %v1458, %v1462
    %vm1464 = vweird.f32 %v1447
    %vm1465 = vweird.f32 %v1458
    %vm1466 = vmor %vm1464, %vm1465
    %v1467 = vsel %vm1466, %v1458, %v1463
    %v1468 = vmul.f32 %v1434, %v1457
    %v1469 = vmul.f32 %v1435, %v1467
    %v1471 = vperm.slane %v1423, 0
    %v1473 = vmul.f32 %v1468, %v1471
    %v1474 = vmul.f32 %v1469, %v1471
    %v1476 = vperm.slane %v1425, 0
    %v1478 = vadd.f32 %v1473, %v1476
    %v1479 = vadd.f32 %v1474, %v1476
    %v1480 = vlaneseq
    %v1481 = vshrl.u32 %v1480, 7
    %v1482 = vlaneseq
    %v1483 = vand.u32 %v1482, 127
    %v1484 = vmul.u32 %v1481, 8
    %vm1485 = vcmp.eq.s32.totalorder %v1483, %v1484
    %v1486 = vsel %vm1485, 1, 0
    %v1487 = vcvt.s32.f32 %v1486
    %v1489 = vsel %vm253, %v1487, 0
    %1491 = vmatpush.msra.mxu0 0.0
    %1492 = vmatpush.msra.mxu0 0.0
    %1493 = vmatpush.msra.mxu0 0.0
    %1494 = vmatpush.msra.mxu0 0.0
    %1495 = vmatpush.msra.mxu0 0.0
    %1496 = vmatpush.msra.mxu0 0.0
    %1497 = vmatpush.msra.mxu0 0.0
    %1498 = vmatpush.msra.mxu0 0.0
    %1499 = vmatpush.msra.mxu0 0.0
    %1500 = vmatpush.msra.mxu0 0.0
    %1501 = vmatpush.msra.mxu0 0.0
    %1502 = vmatpush.msra.mxu0 0.0
    %1503 = vmatpush.msra.mxu0 0.0
    %1504 = vmatpush.msra.mxu0 0.0
    %1505 = vmatpush.msra.mxu0 %v1479
    %1506 = vmatpush.msra.mxu0 %v1478
    %1507 = vmatmul.f32.gmra.mxu0 %v1489
    %v1508 = vpop.f32.mrf.mxu0
    %v1509 = vadd.f32 0.0, %v1508
    %1510 = vdwg.mxu0
    %v1511 = vld [vmem:[%s21] sm:$0xff]
    %v1512 = vld [vmem:[%s21 + $0x8] sm:$0xff]
    %v1513 = vld [vmem:[%s21 + $0x10] sm:$0xff]
    %v1514 = vld [vmem:[%s21 + $0x18] sm:$0xff]
    %v1515 = vld [vmem:[%s22] sm:$0x1]
    %v1517 = vperm.slane %v1515, 0
    %v1520 = vsel %vm88, %v1509, 0
    %1522 = vmatpush.msra.mxu0 0.0
    %1523 = vmatpush.msra.mxu0 0.0
    %1524 = vmatpush.msra.mxu0 0.0
    %1525 = vmatpush.msra.mxu0 0.0
    %1526 = vmatpush.msra.mxu0 0.0
    %1527 = vmatpush.msra.mxu0 0.0
    %1528 = vmatpush.msra.mxu0 0.0
    %1529 = vmatpush.msra.mxu0 0.0
    %1530 = vmatpush.msra.mxu0 0.0
    %1531 = vmatpush.msra.mxu0 0.0
    %1532 = vmatpush.msra.mxu0 0.0
    %1533 = vmatpush.msra.mxu0 0.0
    %1534 = vmatpush.msra.mxu0 %v1514
    %1535 = vmatpush.msra.mxu0 %v1513
    %1536 = vmatpush.msra.mxu0 %v1512
    %1537 = vmatpush.msra.mxu0 %v1511
    %1538 = vmatmul.f32.gmra.mxu0 %v1520
    %v1539 = vpop.f32.mrf.mxu0
    %v1540 = vadd.f32 %v1517, %v1539
    %1541 = vdwg.mxu0
    %v1542 = vtanh.pop %v1540
    %v1543 = vld [vmem:[%s23] sm:$0xff]
    %v1544 = vld [vmem:[%s23 + $0x8] sm:$0xff]
    %v1545 = vld [vmem:[%s23 + $0x10] sm:$0xff]
    %v1546 = vld [vmem:[%s23 + $0x18] sm:$0xff]
    %v1547 = vld [vmem:[%s24] sm:$0x1]
    %v1549 = vperm.slane %v1547, 0
    %v1552 = vsel %vm88, %v1542, 0
    %1554 = vmatpush.msra.mxu0 0.0
    %1555 = vmatpush.msra.mxu0 0.0
    %1556 = vmatpush.msra.mxu0 0.0
    %1557 = vmatpush.msra.mxu0 0.0
    %1558 = vmatpush.msra.mxu0 0.0
    %1559 = vmatpush.msra.mxu0 0.0
    %1560 = vmatpush.msra.mxu0 0.0
    %1561 = vmatpush.msra.mxu0 0.0
    %1562 = vmatpush.msra.mxu0 0.0
    %1563 = vmatpush.msra.mxu0 0.0
    %1564 = vmatpush.msra.mxu0 0.0
    %1565 = vmatpush.msra.mxu0 0.0
    %1566 = vmatpush.msra.mxu0 %v1546
    %1567 = vmatpush.msra.mxu0 %v1545
    %1568 = vmatpush.msra.mxu0 %v1544
    %1569 = vmatpush.msra.mxu0 %v1543
    %1570 = vmatmul.f32.gmra.mxu0 %v1552
    %v1571 = vpop.f32.mrf.mxu0
    %v1572 = vadd.f32 %v1549, %v1571
    %1573 = vdwg.mxu0
    %v1574 = vld [vmem:[%s2] sm:$0x3]
    %vm1575 = vcmask 9216
    %v1576 = vsel %vm1575, %v1572, -inf
    %1577 = vmax.xlane.f32.xlu0 %v1576
    %v1578 = vpop.xlane.xlu0 %1577
    %v1579 = vsub.f32 %v1572, %v1578
    %v1580 = vmul.f32 %v1579, 1.442695
    %v1581 = vpow.pop %v1580
    %v1582 = vsel %vm1575, %v1581, 0.0
    %1583 = vadd.xlane.f32.xlu0 %v1582
    %v1584 = vpop.xlane.xlu0 %1583
    %v1585 = vlog2.pop %v1584
    %v1586 = vmul.f32 %v1585, 0.6931472
    %v1587 = vsub.f32 %v1579, %v1586
    %1588 = vset.pattern.permute.xlu0 0
    %1589 = vperm.xlu0 %1588, %v1574
    %v1590 = vpop.permute.xlu0 %1589
    %vm1591 = vcmp.eq.s32.totalorder %v1483, %v1590
    %v1592 = vsel %vm1591, 1, 0
    %v1593 = vcvt.s32.f32 %v1592
    %v1594 = vmul.f32 %v1587, %v1593
    %v1595 = vsel %vm1575, %v1594, 0.0
    %1596 = vadd.xlane.f32.xlu0 %v1595
    %v1597 = vpop.xlane.xlu0 %1596
    %v1598 = vsub.f32 0.0, %v1597
    %vm1599 = vcmask 1041408
    %v1600 = vsel %vm1599, %v1598, 0.0
    %v1601 = vrot.slane %v1600, 4
    %v1602 = vadd.f32 %v1600, %v1601
    %v1603 = vrot.slane %v1602, 2
    %v1604 = vadd.f32 %v1602, %v1603
    %v1605 = vrot.slane %v1604, 1
    %v1606 = vadd.f32 %v1604, %v1605
    %v1607 = vmul.f32 %v1606, 0.5
    %vm1608 = vcmask 0
    %1609 = vst.msk [vmem:[#allocation2] sm:$0x1] %vm1608, %v1607
    %vm1610 = vcmp.eq.f32.partialorder %v1572, %v1578
    %v1611 = vsel %vm1610, %v1483, 2
    %v1612 = vsel %vm1575, %v1611, 2147483647
    %v1613 = vand.u32 %v1612, 65535
    %v1614 = vshra.s32 %v1612, 16
    %v1615 = vcvt.s32.f32 %v1613
    %v1616 = vcvt.s32.f32 %v1614
    %1617 = vmin.xlane.f32.xlu0 %v1616
    %v1618 = vpop.xlane.xlu0 %1617
    %vm1619 = vcmp.eq.f32.partialorder %v1616, %v1618
    %v1620 = vsel %vm1619, %v1615, inf
    %1621 = vmin.xlane.f32.xlu0 %v1620
    %v1622 = vpop.xlane.xlu0 %1621
    %v1623 = vcvt.f32.s32 %v1622
    %v1624 = vcvt.f32.s32 %v1618
    %v1625 = vshll.u32 %v1624, 16
    %v1626 = vadd.s32 %v1625, %v1623
    %vm1627 = vcmp.eq.s32.totalorder %v1626, %v1574
    %v1628 = vsel %vm1627, 1, 0
    %v1629 = vcvt.s32.f32 %v1628
    %vm1630 = vcmask 1024
    %v1631 = vsel %vm1630, %v1629, 0.0
    %v1632 = vrot.slane %v1631, 4
    %v1633 = vadd.f32 %v1631, %v1632
    %v1634 = vrot.slane %v1633, 2
    %v1635 = vadd.f32 %v1633, %v1634
    %v1636 = vrot.slane %v1635, 1
    %v1637 = vadd.f32 %v1635, %v1636
    %1638 = vst.msk [vmem:[#allocation4] sm:$0x1] %vm1608, %v1637
    // Predicated region
    $region102: #{_forward_core.1} parent=1 // pred_check
      _
    $region103: #{_forward_core.1} parent=1 // pred_check_branch
      %1640 = sbr.rel (0) target = $region105
    $region104: #{_forward_core.1} parent=1 // pred_region
      %1642 = vsyncadd [#allocation3], 0
      %s1644 = sshll.u32 [#allocation2], 4
      %s1645 = int_to_ptr.vmem [resolvable:$true] %s1644
      %s1646 = sshll.u32 %s25, 4
      %s1647 = int_to_ptr.hbm [resolvable:$true] %s1646
      %1649 = dma.vmem_to_hbm [thread:$0]  %s1645, 16, %s1647, [#allocation3]
    $region105: #{_forward_core.1} parent=1 // pred_fallthru
      _
    // Predicated region
    $region106: #{_forward_core.1} parent=1 // pred_check
      _
    $region107: #{_forward_core.1} parent=1 // pred_check_branch
      %1651 = sbr.rel (0) target = $region109
    $region108: #{_forward_core.1} parent=1 // pred_region
      %1653 = vsyncadd [#allocation5], 0
      %s1655 = sshll.u32 [#allocation4], 4
      %s1656 = int_to_ptr.vmem [resolvable:$true] %s1655
      %s1657 = sshll.u32 %s26, 4
      %s1658 = int_to_ptr.hbm [resolvable:$true] %s1657
      %1660 = dma.vmem_to_hbm [thread:$0]  %s1656, 16, %s1658, [#allocation5]
    $region109: #{_forward_core.1} parent=1 // pred_fallthru
      _
    // Predicated region
    $region110: #{_forward_core.1} parent=1 // pred_check
      _
    $region111: #{_forward_core.1} parent=1 // pred_check_branch
      %1662 = sbr.rel (0) target = $region113
    $region112: #{_forward_core.1} parent=1 // pred_region
      %1664 = dma.done [#allocation3], 16
    $region113: #{_forward_core.1} parent=1 // pred_fallthru
      _
    // Predicated region
    $region114: #{_forward_core.1} parent=1 // pred_check
      _
    $region115: #{_forward_core.1} parent=1 // pred_check_branch
      %1666 = sbr.rel (0) target = $region117
    $region116: #{_forward_core.1} parent=1 // pred_region
      %1668 = dma.done [#allocation5], 16
    $region117: #{_forward_core.1} parent=1 // pred_fallthru
      _
    %1669 = vsyncpa [#allocation3], 1
    %1670 = vsyncpa [#allocation5], 1

</llo_original>
